<compile_context>
chip_gen: v7x
topology: tpu7x:2x2x1
jax: 0.10.0
libtpu: 0.0.40
codegen_flags: <defaults>
</compile_context>

<pallas_src>
import math

import numpy as np
import jax
import jax.numpy as jnp
from jax import lax
from jax.experimental import pallas as pl
from jax.experimental.pallas import tpu as pltpu


# ----------------------------------------------------------------------------
# Positional-encoding buffer (replica of PositionalEncoding.__init__)
# ----------------------------------------------------------------------------
def _positional_encoding(max_len, d_model):
    pe = np.zeros((max_len, d_model), dtype=np.float32)
    position = np.arange(0, max_len, dtype=np.float32)[:, None]
    angular_speed = np.exp(np.arange(0, d_model, 2, dtype=np.float32)
                           * (-math.log(10000.0) / d_model))
    pe[:, 0::2] = np.sin(position * angular_speed)
    pe[:, 1::2] = np.cos(position * angular_speed)
    return jnp.asarray(pe)


# ----------------------------------------------------------------------------
# Kernel
# ----------------------------------------------------------------------------
def _make_kernel(*, n_heads, d_model, L, batch_tile, pe_dim, compute_dtype,
                 use_mask):
    pe_scale = np.float32(math.sqrt(pe_dim))
    cd = jnp.dtype(compute_dtype)
    approx_recip = cd != jnp.dtype(jnp.float32)   # EUP vrcp on the bf16 path
    rows = batch_tile * L
    HD = n_heads * d_model

    def kernel(*refs):
        it = iter(refs)
        q_ref = next(it)       # (bt, L, F)   f32   batch tile of the query
        pe_ref = next(it)      # (L, F)       f32   grid-invariant PE table
        wqkv_ref = next(it)    # (F, 3*H*D)   cd    fused Q|K|V weight (q pre-scaled)
        bqkv_ref = next(it)    # (1, 3*H*D)   f32
        wo_ref = next(it)      # (H*D, D)     cd    Wo.T
        bo_ref = next(it)      # (1, D)       f32
        w1_ref = next(it)      # (D, FF)      cd
        b1_ref = next(it)      # (1, FF)      f32
        w2_ref = next(it)      # (FF, D)      cd
        b2_ref = next(it)      # (1, D)       f32
        m_ref = next(it) if use_mask else None   # (bt, L, L) int8
        out_ref = next(it)     # (rows, D)

        # --- positional encoding: broadcast one (L, F) table over the tile ---
        x = q_ref[...] * pe_scale + pe_ref[...][None, :, :]        # (bt, L, F) f32
        xc = x.reshape(rows, pe_dim).astype(cd)

        # --- fused Q/K/V projection for all heads: ONE fat-N MXU matmul ------
        qkv = (jnp.dot(xc, wqkv_ref[...], preferred_element_type=jnp.float32)
               + bqkv_ref[...]).astype(cd)                          # (rows, 3*H*D)

        # --- mask compare hoisted out of the head loop -----------------------
        if use_mask:
            keep = m_ref[...] != 0                                  # (bt, L, L) bool

        # --- per-head attention (batched over the tile via einsum) -----------
        ctx_cols = []
        for h in range(n_heads):
            c0 = h * d_model
            pq = qkv[:, c0:c0 + d_model].reshape(batch_tile, L, d_model)
            pk = qkv[:, HD + c0:HD + c0 + d_model].reshape(batch_tile, L, d_model)
            pv = qkv[:, 2 * HD + c0:2 * HD + c0 + d_model].reshape(batch_tile, L, d_model)
            # 1/sqrt(d_k) already folded into Wq/bq at pack time.
            scores = jnp.einsum('bqd,bkd->bqk', pq, pk,
                                preferred_element_type=jnp.float32)
            if use_mask:
                scores = jnp.where(keep, scores, jnp.float32(-1e9))
            # numerically stable softmax, f32 (VPU/EUP)
            smax = jnp.max(scores, axis=-1, keepdims=True)
            e = jnp.exp(scores - smax)
            denom = jnp.sum(e, axis=-1, keepdims=True)
            alphas = e * pl.reciprocal(denom, approx=approx_recip)
            ctx = jnp.einsum('bqk,bkd->bqd', alphas.astype(cd), pv,
                             preferred_element_type=jnp.float32)
            ctx_cols.append(ctx.reshape(rows, d_model).astype(cd))

        # --- multi-head output projection: single matmul with K = H*D --------
        ctx_all = ctx_cols[0] if n_heads == 1 else jnp.concatenate(ctx_cols, axis=-1)
        att = jnp.dot(ctx_all, wo_ref[...],
                      preferred_element_type=jnp.float32) + bo_ref[...]

        # --- position-wise feed-forward, fused over the whole tile -----------
        hidden = jnp.maximum(
            jnp.dot(att.astype(cd), w1_ref[...],
                    preferred_element_type=jnp.float32) + b1_ref[...], 0.0)
        out = jnp.dot(hidden.astype(cd), w2_ref[...],
                      preferred_element_type=jnp.float32) + b2_ref[...]
        out_ref[...] = out.astype(out_ref.dtype)

    return kernel


# ----------------------------------------------------------------------------
# Wrapper
# ----------------------------------------------------------------------------
def _pick_batch_tile(B, L, target_rows=256):
    """Largest divisor of B with bt*L <= target_rows, preferring >= 2 grid steps."""
    divisors = [d for d in range(1, B + 1) if B % d == 0]
    cap = max(1, target_rows // max(L, 1))
    cands = [d for d in divisors if d <= cap and B // d >= 2]
    if not cands:
        cands = [d for d in divisors if d <= cap] or [1]
    return max(cands)


def encoder_pe_forward(query, params, mask=None, *, batch_tile=None,
                       compute_dtype=jnp.bfloat16, out_dtype=jnp.float32):
    """Pallas-backed EncoderPe forward.

    query : (B, L, F) f32   (F = n_features, or d_model if n_features is None)
    mask  : optional (B, L, L) int; entries == 0 are masked out.
    Returns out : (B, L, d_model) in `out_dtype` (f32 by default).
    """
    B, L, F = query.shape
    n_heads, d_model, in_dim = params["wq"].shape
    assert in_dim == F
    ff_units = params["w1"].shape[0]
    if batch_tile is None:
        batch_tile = _pick_batch_tile(B, L)
    assert B % batch_tile == 0
    bt = batch_tile
    rows = bt * L
    use_mask = mask is not None
    cd = jnp.dtype(compute_dtype)
    inv_sqrt_dk = 1.0 / math.sqrt(d_model)

    # ---- one-time, loop-invariant packing outside the kernel -----------------
    pe = params["pe"][:L]                                          # (L, F), streamed once

    def heads_to_cols(w):      # (H, D_out, F) torch layout -> (F, H*D_out)
        return jnp.transpose(w, (2, 0, 1)).reshape(F, -1)

    # fused QKV weight; 1/sqrt(d_k) folded into Wq / bq at pack time
    w_qkv = jnp.concatenate(
        [heads_to_cols(params["wq"]) * inv_sqrt_dk,
         heads_to_cols(params["wk"]),
         heads_to_cols(params["wv"])], axis=1).astype(cd)          # (F, 3*H*D)
    b_qkv = jnp.concatenate(
        [params["bq"].reshape(-1) * inv_sqrt_dk,
         params["bk"].reshape(-1),
         params["bv"].reshape(-1)])[None, :]                       # (1, 3*H*D) f32

    wo_t = params["wo"].T.astype(cd)                               # (H*D, D)
    bo = params["bo"][None, :]
    w1_t = params["w1"].T.astype(cd)                               # (D, FF)
    b1 = params["b1"][None, :]
    w2_t = params["w2"].T.astype(cd)                               # (FF, D)
    b2 = params["b2"][None, :]

    invariants = [pe, w_qkv, b_qkv, wo_t, bo, w1_t, b1, w2_t, b2]
    inputs = [query] + invariants
    if use_mask:
        inputs.append(mask.astype(jnp.int8))                       # int8 mask

    kernel = _make_kernel(n_heads=n_heads, d_model=d_model, L=L, batch_tile=bt,
                          pe_dim=F, compute_dtype=cd, use_mask=use_mask)

    def build(single_buffer_invariants):
        # Grid-invariant operands never change block index -> a second pipeline
        # buffer is wasted VMEM. Request single-buffering for them.
        inv_kwargs = ({"pipeline_mode": pl.Buffered(1)}
                      if single_buffer_invariants else {})
        in_specs = [pl.BlockSpec((bt, L, F), lambda i: (i, 0, 0))]
        in_specs += [pl.BlockSpec(tuple(a.shape), lambda i: (0, 0), **inv_kwargs)
                     for a in invariants]
        if use_mask:
            in_specs.append(pl.BlockSpec((bt, L, L), lambda i: (i, 0, 0)))
        return pl.pallas_call(
            kernel,
            out_shape=jax.ShapeDtypeStruct((B * L, d_model), out_dtype),
            grid_spec=pltpu.PrefetchScalarGridSpec(
                num_scalar_prefetch=0,
                grid=(B // bt,),
                in_specs=in_specs,
                # NOTE: at realistic d_model (>=128) this output is lane-dense;
                # at the demo d_model=32 the store is lane-masked but tiny.
                out_specs=pl.BlockSpec((rows, d_model), lambda i: (i, 0)),
            ),
            compiler_params=pltpu.CompilerParams(
                dimension_semantics=("parallel",),     # megacore over batch tiles
                vmem_limit_bytes=32 * 1024 * 1024),    # safe on v7x's 64 MiB VMEM
        )

    try:
        out_flat = build(True)(*inputs)
    except Exception:
        # pipeline_mode=pl.Buffered(1) unsupported on this JAX/libtpu build:
        # fall back to default double-buffering (identical results, more VMEM).
        out_flat = build(False)(*inputs)
    return out_flat.reshape(B, L, d_model)


# ----------------------------------------------------------------------------
# Pure-JAX reference (matches the PyTorch module, f32, HIGHEST precision)
# ----------------------------------------------------------------------------
def _reference_forward(query, params, mask=None):
    B, L, F = query.shape
    n_heads, d_model, _ = params["wq"].shape
    hp = lax.Precision.HIGHEST
    pe = params["pe"][:L]
    x = query * math.sqrt(F) + pe[None]
    contexts = []
    for h in range(n_heads):
        pq = jnp.einsum("blf,df->bld", x, params["wq"][h], precision=hp) + params["bq"][h]
        pk = jnp.einsum("blf,df->bld", x, params["wk"][h], precision=hp) + params["bk"][h]
        pv = jnp.einsum("blf,df->bld", x, params["wv"][h], precision=hp) + params["bv"][h]
        scores = jnp.einsum("bqd,bkd->bqk", pq, pk, precision=hp) / math.sqrt(d_model)
        if mask is not None:
            scores = jnp.where(mask == 0, -1e9, scores)
        alphas = jax.nn.softmax(scores, axis=-1)
        contexts.append(jnp.einsum("bqk,bkd->bqd", alphas, pv, precision=hp))
    concat = jnp.concatenate(contexts, axis=-1)
    att = jnp.einsum("blc,dc->bld", concat, params["wo"], precision=hp) + params["bo"]
    hidden = jax.nn.relu(
        jnp.einsum("bld,fd->blf", att, params["w1"], precision=hp) + params["b1"])
    out = jnp.einsum("blf,df->bld", hidden, params["w2"], precision=hp) + params["b2"]
    return out


# ----------------------------------------------------------------------------
# Parameter init (PyTorch nn.Linear layout + uniform(+-1/sqrt(fan_in)) init)
# ----------------------------------------------------------------------------
def _init_params(key, *, n_heads, d_model, ff_units, n_features=None, max_len=100):
    in_dim = d_model if n_features is None else n_features

    def lin(k, out_f, in_f):
        kw, kb = jax.random.split(k)
        bound = 1.0 / math.sqrt(in_f)
        w = jax.random.uniform(kw, (out_f, in_f), jnp.float32, -bound, bound)
        b = jax.random.uniform(kb, (out_f,), jnp.float32, -bound, bound)
        return w, b

    ks = jax.random.split(key, 3 * n_heads + 3)
    wq, bq = zip(*(lin(ks[h], d_model, in_dim) for h in range(n_heads)))
    wk, bk = zip(*(lin(ks[n_heads + h], d_model, in_dim) for h in range(n_heads)))
    wv, bv = zip(*(lin(ks[2 * n_heads + h], d_model, in_dim) for h in range(n_heads)))
    wo, bo = lin(ks[-3], d_model, n_heads * d_model)
    w1, b1 = lin(ks[-2], ff_units, d_model)
    w2, b2 = lin(ks[-1], d_model, ff_units)
    return dict(
        wq=jnp.stack(wq), bq=jnp.stack(bq),
        wk=jnp.stack(wk), bk=jnp.stack(bk),
        wv=jnp.stack(wv), bv=jnp.stack(bv),
        wo=wo, bo=bo, w1=w1, b1=b1, w2=w2, b2=b2,
        pe=_positional_encoding(max_len, in_dim),
    )


if __name__ == "__main__":
    key = jax.random.PRNGKey(0)
    B, L, n_heads, d_model, ff_units = 2, 8, 2, 32, 64

    k_p, k_q, k_m = jax.random.split(key, 3)
    params = _init_params(k_p, n_heads=n_heads, d_model=d_model,
                          ff_units=ff_units, n_features=None, max_len=100)
    query = 0.3 * jax.random.normal(k_q, (B, L, d_model), jnp.float32)
    # mask: 1 = keep, 0 = masked out (masked_fill(mask == 0, -1e9))
    mask = (jax.random.uniform(k_m, (B, L, L)) > 0.2).astype(jnp.int32)

    ref_masked = jax.block_until_ready(_reference_forward(query, params, mask=mask))
    ref_plain = jax.block_until_ready(_reference_forward(query, params, mask=None))

    ok = True

    # 1) f32 compute path, whole batch fused into a single grid step:
    #    validates semantics against the PyTorch-equivalent reference.
    out_f32 = jax.block_until_ready(
        encoder_pe_forward(query, params, mask=mask,
                           batch_tile=2, compute_dtype=jnp.float32))
    ok &= bool(jnp.allclose(out_f32, ref_masked, atol=2e-2, rtol=2e-2))

    # 2) default fast path: bf16 MXU operands, f32 accumulation, auto batch_tile
    #    (-> grid of 2 parallel steps so both v7x TensorCores get work).
    out_bf16 = jax.block_until_ready(
        encoder_pe_forward(query, params, mask=mask, compute_dtype=jnp.bfloat16))
    ok &= bool(jnp.allclose(out_bf16, ref_masked, atol=1e-1, rtol=1e-1))

    # 3) no-mask path + bf16 output writeback (halved output HBM traffic).
    out_nm = jax.block_until_ready(
        encoder_pe_forward(query, params, mask=None,
                           compute_dtype=jnp.bfloat16, out_dtype=jnp.bfloat16))
    ok &= bool(jnp.allclose(out_nm.astype(jnp.float32), ref_plain,
                            atol=1e-1, rtol=1e-1))

    print("KERNEL_OK" if ok else "KERNEL_MISMATCH")
</pallas_src>

<mosaic_0001>
module attributes {stable_mosaic.version = 11 : i64} {
  func.func @kernel(%arg0: i32, %arg1: memref<2x8x32xf32, #tpu.memory_space<vmem>>, %arg2: memref<8x32xf32, #tpu.memory_space<vmem>>, %arg3: memref<32x192xf32, #tpu.memory_space<vmem>>, %arg4: memref<1x192xf32, #tpu.memory_space<vmem>>, %arg5: memref<64x32xf32, #tpu.memory_space<vmem>>, %arg6: memref<1x32xf32, #tpu.memory_space<vmem>>, %arg7: memref<32x64xf32, #tpu.memory_space<vmem>>, %arg8: memref<1x64xf32, #tpu.memory_space<vmem>>, %arg9: memref<64x32xf32, #tpu.memory_space<vmem>>, %arg10: memref<1x32xf32, #tpu.memory_space<vmem>>, %arg11: memref<2x8x8xi8, #tpu.memory_space<vmem>>, %arg12: memref<16x32xf32, #tpu.memory_space<vmem>>) attributes {dimension_semantics = [#tpu.dimension_semantics<parallel>], iteration_bounds = array<i64: 1>, scalar_prefetch = 0 : i64, scratch_operands = 0 : i64, tpu.core_type = #tpu.core_type<tc>, window_params = [{transform_indices = @transform_0, window_bounds = array<i64: 2, 8, 32>}, {pipeline_mode = #tpu.pipeline_mode<synchronous>, transform_indices = @transform_1, window_bounds = array<i64: 8, 32>}, {pipeline_mode = #tpu.pipeline_mode<synchronous>, transform_indices = @transform_2, window_bounds = array<i64: 32, 192>}, {pipeline_mode = #tpu.pipeline_mode<synchronous>, transform_indices = @transform_3, window_bounds = array<i64: 1, 192>}, {pipeline_mode = #tpu.pipeline_mode<synchronous>, transform_indices = @transform_4, window_bounds = array<i64: 64, 32>}, {pipeline_mode = #tpu.pipeline_mode<synchronous>, transform_indices = @transform_5, window_bounds = array<i64: 1, 32>}, {pipeline_mode = #tpu.pipeline_mode<synchronous>, transform_indices = @transform_6, window_bounds = array<i64: 32, 64>}, {pipeline_mode = #tpu.pipeline_mode<synchronous>, transform_indices = @transform_7, window_bounds = array<i64: 1, 64>}, {pipeline_mode = #tpu.pipeline_mode<synchronous>, transform_indices = @transform_8, window_bounds = array<i64: 64, 32>}, {pipeline_mode = #tpu.pipeline_mode<synchronous>, transform_indices = @transform_9, window_bounds = array<i64: 1, 32>}, {transform_indices = @transform_10, window_bounds = array<i64: 2, 8, 8>}, {transform_indices = @transform_11, window_bounds = array<i64: 16, 32>}]} {
    %c0 = arith.constant 0 : index
    %c0_0 = arith.constant 0 : index
    %c0_1 = arith.constant 0 : index
    %0 = vector.load %arg1[%c0, %c0_0, %c0_1] : memref<2x8x32xf32, #tpu.memory_space<vmem>>, vector<2x8x32xf32>
    %cst = arith.constant 5.65685415 : f32
    %1 = vector.broadcast %cst : f32 to vector<2x8x32xf32>
    %2 = arith.mulf %0, %1 : vector<2x8x32xf32>
    %c0_2 = arith.constant 0 : index
    %c0_3 = arith.constant 0 : index
    %3 = vector.load %arg2[%c0_2, %c0_3] : memref<8x32xf32, #tpu.memory_space<vmem>>, vector<8x32xf32>
    %4 = vector.shape_cast %3 : vector<8x32xf32> to vector<1x8x32xf32>
    %5 = vector.broadcast %4 : vector<1x8x32xf32> to vector<2x8x32xf32>
    %6 = arith.addf %2, %5 : vector<2x8x32xf32>
    %7 = vector.shape_cast %6 : vector<2x8x32xf32> to vector<16x32xf32>
    %c0_4 = arith.constant 0 : index
    %c0_5 = arith.constant 0 : index
    %8 = vector.load %arg3[%c0_4, %c0_5] : memref<32x192xf32, #tpu.memory_space<vmem>>, vector<32x192xf32>
    %cst_6 = arith.constant dense<0.000000e+00> : vector<16x192xf32>
    %9 = tpu.matmul %7, %8, %cst_6 {dimension_numbers = #tpu.dot_dimension_numbers<[1], [0], [0], [1], [0, 0, 1, 1], [], []>} : vector<16x32xf32>, vector<32x192xf32>, vector<16x192xf32> -> vector<16x192xf32>
    %c0_7 = arith.constant 0 : index
    %c0_8 = arith.constant 0 : index
    %10 = vector.load %arg4[%c0_7, %c0_8] : memref<1x192xf32, #tpu.memory_space<vmem>>, vector<1x192xf32>
    %11 = vector.broadcast %10 : vector<1x192xf32> to vector<16x192xf32>
    %12 = arith.addf %9, %11 : vector<16x192xf32>
    %c0_9 = arith.constant 0 : index
    %c0_10 = arith.constant 0 : index
    %c0_11 = arith.constant 0 : index
    %13 = vector.load %arg11[%c0_9, %c0_10, %c0_11] : memref<2x8x8xi8, #tpu.memory_space<vmem>>, vector<2x8x8xi8>
    %c0_i8 = arith.constant 0 : i8
    %14 = vector.broadcast %c0_i8 : i8 to vector<2x8x8xi8>
    %15 = arith.cmpi ne, %13, %14 : vector<2x8x8xi8>
    %16 = vector.extract_strided_slice %12 {offsets = [0, 0], sizes = [16, 32], strides = [1, 1]} : vector<16x192xf32> to vector<16x32xf32>
    %17 = vector.shape_cast %16 : vector<16x32xf32> to vector<2x8x32xf32>
    %18 = vector.extract_strided_slice %12 {offsets = [0, 64], sizes = [16, 32], strides = [1, 1]} : vector<16x192xf32> to vector<16x32xf32>
    %19 = vector.shape_cast %18 : vector<16x32xf32> to vector<2x8x32xf32>
    %20 = vector.extract_strided_slice %12 {offsets = [0, 128], sizes = [16, 32], strides = [1, 1]} : vector<16x192xf32> to vector<16x32xf32>
    %21 = vector.shape_cast %20 : vector<16x32xf32> to vector<2x8x32xf32>
    "tpu.trace_start"() <{level = 10 : i32, message = "bqd,bkd->bqk"}> : () -> ()
    %cst_12 = arith.constant dense<0.000000e+00> : vector<2x8x8xf32>
    %22 = tpu.matmul %17, %19, %cst_12 {dimension_numbers = #tpu.dot_dimension_numbers<[2], [2], [1], [1], [0, 0, 0, 1, 1, 1], [0], [0]>} : vector<2x8x32xf32>, vector<2x8x32xf32>, vector<2x8x8xf32> -> vector<2x8x8xf32>
    %cst_13 = arith.constant -1.000000e+09 : f32
    "tpu.trace_stop"() : () -> ()
    %23 = vector.broadcast %cst_13 : f32 to vector<2x8x8xf32>
    %24 = arith.select %15, %22, %23 : vector<2x8x8xi1>, vector<2x8x8xf32>
    %cst_14 = arith.constant dense<0xFF800000> : vector<2x8xf32>
    %25 = vector.multi_reduction <maximumf>, %24, %cst_14 [2] : vector<2x8x8xf32> to vector<2x8xf32>
    %26 = vector.shape_cast %25 : vector<2x8xf32> to vector<2x8x1xf32>
    %27 = vector.broadcast %26 : vector<2x8x1xf32> to vector<2x8x8xf32>
    %28 = arith.subf %24, %27 : vector<2x8x8xf32>
    %29 = math.exp %28 : vector<2x8x8xf32>
    %cst_15 = arith.constant dense<0.000000e+00> : vector<2x8xf32>
    %30 = vector.multi_reduction <add>, %29, %cst_15 [2] : vector<2x8x8xf32> to vector<2x8xf32>
    %31 = vector.shape_cast %30 : vector<2x8xf32> to vector<2x8x1xf32>
    %32 = tpu.reciprocal %31 : vector<2x8x1xf32> -> vector<2x8x1xf32>
    %33 = vector.broadcast %32 : vector<2x8x1xf32> to vector<2x8x8xf32>
    %34 = arith.mulf %29, %33 : vector<2x8x8xf32>
    "tpu.trace_start"() <{level = 10 : i32, message = "bqk,bkd->bqd"}> : () -> ()
    %cst_16 = arith.constant dense<0.000000e+00> : vector<2x8x32xf32>
    %35 = tpu.matmul %34, %21, %cst_16 {dimension_numbers = #tpu.dot_dimension_numbers<[2], [1], [1], [2], [0, 0, 0, 1, 1, 2], [0], [0]>} : vector<2x8x8xf32>, vector<2x8x32xf32>, vector<2x8x32xf32> -> vector<2x8x32xf32>
    "tpu.trace_stop"() : () -> ()
    %36 = vector.shape_cast %35 : vector<2x8x32xf32> to vector<16x32xf32>
    %37 = vector.extract_strided_slice %12 {offsets = [0, 32], sizes = [16, 32], strides = [1, 1]} : vector<16x192xf32> to vector<16x32xf32>
    %38 = vector.shape_cast %37 : vector<16x32xf32> to vector<2x8x32xf32>
    %39 = vector.extract_strided_slice %12 {offsets = [0, 96], sizes = [16, 32], strides = [1, 1]} : vector<16x192xf32> to vector<16x32xf32>
    %40 = vector.shape_cast %39 : vector<16x32xf32> to vector<2x8x32xf32>
    %41 = vector.extract_strided_slice %12 {offsets = [0, 160], sizes = [16, 32], strides = [1, 1]} : vector<16x192xf32> to vector<16x32xf32>
    %42 = vector.shape_cast %41 : vector<16x32xf32> to vector<2x8x32xf32>
    "tpu.trace_start"() <{level = 10 : i32, message = "bqd,bkd->bqk"}> : () -> ()
    %cst_17 = arith.constant dense<0.000000e+00> : vector<2x8x8xf32>
    %43 = tpu.matmul %38, %40, %cst_17 {dimension_numbers = #tpu.dot_dimension_numbers<[2], [2], [1], [1], [0, 0, 0, 1, 1, 1], [0], [0]>} : vector<2x8x32xf32>, vector<2x8x32xf32>, vector<2x8x8xf32> -> vector<2x8x8xf32>
    %cst_18 = arith.constant -1.000000e+09 : f32
    "tpu.trace_stop"() : () -> ()
    %44 = vector.broadcast %cst_18 : f32 to vector<2x8x8xf32>
    %45 = arith.select %15, %43, %44 : vector<2x8x8xi1>, vector<2x8x8xf32>
    %cst_19 = arith.constant dense<0xFF800000> : vector<2x8xf32>
    %46 = vector.multi_reduction <maximumf>, %45, %cst_19 [2] : vector<2x8x8xf32> to vector<2x8xf32>
    %47 = vector.shape_cast %46 : vector<2x8xf32> to vector<2x8x1xf32>
    %48 = vector.broadcast %47 : vector<2x8x1xf32> to vector<2x8x8xf32>
    %49 = arith.subf %45, %48 : vector<2x8x8xf32>
    %50 = math.exp %49 : vector<2x8x8xf32>
    %cst_20 = arith.constant dense<0.000000e+00> : vector<2x8xf32>
    %51 = vector.multi_reduction <add>, %50, %cst_20 [2] : vector<2x8x8xf32> to vector<2x8xf32>
    %52 = vector.shape_cast %51 : vector<2x8xf32> to vector<2x8x1xf32>
    %53 = tpu.reciprocal %52 : vector<2x8x1xf32> -> vector<2x8x1xf32>
    %54 = vector.broadcast %53 : vector<2x8x1xf32> to vector<2x8x8xf32>
    %55 = arith.mulf %50, %54 : vector<2x8x8xf32>
    "tpu.trace_start"() <{level = 10 : i32, message = "bqk,bkd->bqd"}> : () -> ()
    %cst_21 = arith.constant dense<0.000000e+00> : vector<2x8x32xf32>
    %56 = tpu.matmul %55, %42, %cst_21 {dimension_numbers = #tpu.dot_dimension_numbers<[2], [1], [1], [2], [0, 0, 0, 1, 1, 2], [0], [0]>} : vector<2x8x8xf32>, vector<2x8x32xf32>, vector<2x8x32xf32> -> vector<2x8x32xf32>
    "tpu.trace_stop"() : () -> ()
    %57 = vector.shape_cast %56 : vector<2x8x32xf32> to vector<16x32xf32>
    %58 = tpu.concatenate %36, %57 in 1 : vector<16x32xf32>, vector<16x32xf32> -> vector<16x64xf32>
    %c0_22 = arith.constant 0 : index
    %c0_23 = arith.constant 0 : index
    %59 = vector.load %arg5[%c0_22, %c0_23] : memref<64x32xf32, #tpu.memory_space<vmem>>, vector<64x32xf32>
    %cst_24 = arith.constant dense<0.000000e+00> : vector<16x32xf32>
    %60 = tpu.matmul %58, %59, %cst_24 {dimension_numbers = #tpu.dot_dimension_numbers<[1], [0], [0], [1], [0, 0, 1, 1], [], []>} : vector<16x64xf32>, vector<64x32xf32>, vector<16x32xf32> -> vector<16x32xf32>
    %c0_25 = arith.constant 0 : index
    %c0_26 = arith.constant 0 : index
    %61 = vector.load %arg6[%c0_25, %c0_26] : memref<1x32xf32, #tpu.memory_space<vmem>>, vector<1x32xf32>
    %62 = vector.broadcast %61 : vector<1x32xf32> to vector<16x32xf32>
    %63 = arith.addf %60, %62 : vector<16x32xf32>
    %c0_27 = arith.constant 0 : index
    %c0_28 = arith.constant 0 : index
    %64 = vector.load %arg7[%c0_27, %c0_28] : memref<32x64xf32, #tpu.memory_space<vmem>>, vector<32x64xf32>
    %cst_29 = arith.constant dense<0.000000e+00> : vector<16x64xf32>
    %65 = tpu.matmul %63, %64, %cst_29 {dimension_numbers = #tpu.dot_dimension_numbers<[1], [0], [0], [1], [0, 0, 1, 1], [], []>} : vector<16x32xf32>, vector<32x64xf32>, vector<16x64xf32> -> vector<16x64xf32>
    %c0_30 = arith.constant 0 : index
    %c0_31 = arith.constant 0 : index
    %66 = vector.load %arg8[%c0_30, %c0_31] : memref<1x64xf32, #tpu.memory_space<vmem>>, vector<1x64xf32>
    %67 = vector.broadcast %66 : vector<1x64xf32> to vector<16x64xf32>
    %68 = arith.addf %65, %67 : vector<16x64xf32>
    %cst_32 = arith.constant 0.000000e+00 : f32
    %69 = vector.broadcast %cst_32 : f32 to vector<16x64xf32>
    %70 = arith.maximumf %68, %69 : vector<16x64xf32>
    %c0_33 = arith.constant 0 : index
    %c0_34 = arith.constant 0 : index
    %71 = vector.load %arg9[%c0_33, %c0_34] : memref<64x32xf32, #tpu.memory_space<vmem>>, vector<64x32xf32>
    %cst_35 = arith.constant dense<0.000000e+00> : vector<16x32xf32>
    %72 = tpu.matmul %70, %71, %cst_35 {dimension_numbers = #tpu.dot_dimension_numbers<[1], [0], [0], [1], [0, 0, 1, 1], [], []>} : vector<16x64xf32>, vector<64x32xf32>, vector<16x32xf32> -> vector<16x32xf32>
    %c0_36 = arith.constant 0 : index
    %c0_37 = arith.constant 0 : index
    %73 = vector.load %arg10[%c0_36, %c0_37] : memref<1x32xf32, #tpu.memory_space<vmem>>, vector<1x32xf32>
    %74 = vector.broadcast %73 : vector<1x32xf32> to vector<16x32xf32>
    %75 = arith.addf %72, %74 : vector<16x32xf32>
    %c0_38 = arith.constant 0 : index
    %c0_39 = arith.constant 0 : index
    %76 = vector.load %arg12[%c0_38, %c0_39] : memref<16x32xf32, #tpu.memory_space<vmem>>, vector<16x32xf32>
    tpu.vector_store %arg12[%c0_38, %c0_39], %75 {strides = array<i32>} : memref<16x32xf32, #tpu.memory_space<vmem>>, vector<16x32xf32>,
    return
  }
  func.func @transform_0(%arg0: i32) -> (i32, i32, i32) {
    %c0_i32 = arith.constant 0 : i32
    %c0_i32_0 = arith.constant 0 : i32
    %c0_i32_1 = arith.constant 0 : i32
    return %arg0, %c0_i32, %c0_i32_0 : i32, i32, i32
  }
  func.func @transform_1(%arg0: i32) -> (i32, i32) {
    %c0_i32 = arith.constant 0 : i32
    %c0_i32_0 = arith.constant 0 : i32
    %c0_i32_1 = arith.constant 0 : i32
    return %c0_i32, %c0_i32_0 : i32, i32
  }
  func.func @transform_2(%arg0: i32) -> (i32, i32) {
    %c0_i32 = arith.constant 0 : i32
    %c0_i32_0 = arith.constant 0 : i32
    %c0_i32_1 = arith.constant 0 : i32
    return %c0_i32, %c0_i32_0 : i32, i32
  }
  func.func @transform_3(%arg0: i32) -> (i32, i32) {
    %c0_i32 = arith.constant 0 : i32
    %c0_i32_0 = arith.constant 0 : i32
    %c0_i32_1 = arith.constant 0 : i32
    return %c0_i32, %c0_i32_0 : i32, i32
  }
  func.func @transform_4(%arg0: i32) -> (i32, i32) {
    %c0_i32 = arith.constant 0 : i32
    %c0_i32_0 = arith.constant 0 : i32
    %c0_i32_1 = arith.constant 0 : i32
    return %c0_i32, %c0_i32_0 : i32, i32
  }
  func.func @transform_5(%arg0: i32) -> (i32, i32) {
    %c0_i32 = arith.constant 0 : i32
    %c0_i32_0 = arith.constant 0 : i32
    %c0_i32_1 = arith.constant 0 : i32
    return %c0_i32, %c0_i32_0 : i32, i32
  }
  func.func @transform_6(%arg0: i32) -> (i32, i32) {
    %c0_i32 = arith.constant 0 : i32
    %c0_i32_0 = arith.constant 0 : i32
    %c0_i32_1 = arith.constant 0 : i32
    return %c0_i32, %c0_i32_0 : i32, i32
  }
  func.func @transform_7(%arg0: i32) -> (i32, i32) {
    %c0_i32 = arith.constant 0 : i32
    %c0_i32_0 = arith.constant 0 : i32
    %c0_i32_1 = arith.constant 0 : i32
    return %c0_i32, %c0_i32_0 : i32, i32
  }
  func.func @transform_8(%arg0: i32) -> (i32, i32) {
    %c0_i32 = arith.constant 0 : i32
    %c0_i32_0 = arith.constant 0 : i32
    %c0_i32_1 = arith.constant 0 : i32
    return %c0_i32, %c0_i32_0 : i32, i32
  }
  func.func @transform_9(%arg0: i32) -> (i32, i32) {
    %c0_i32 = arith.constant 0 : i32
    %c0_i32_0 = arith.constant 0 : i32
    %c0_i32_1 = arith.constant 0 : i32
    return %c0_i32, %c0_i32_0 : i32, i32
  }
  func.func @transform_10(%arg0: i32) -> (i32, i32, i32) {
    %c0_i32 = arith.constant 0 : i32
    %c0_i32_0 = arith.constant 0 : i32
    %c0_i32_1 = arith.constant 0 : i32
    return %arg0, %c0_i32, %c0_i32_0 : i32, i32, i32
  }
  func.func @transform_11(%arg0: i32) -> (i32, i32) {
    %c0_i32 = arith.constant 0 : i32
    %c0_i32_0 = arith.constant 0 : i32
    return %arg0, %c0_i32 : i32, i32
  }
}

module attributes {stable_mosaic.version = 11 : i64} {
  func.func @kernel(%arg0: i32, %arg1: memref<2x8x32xf32, #tpu.memory_space<vmem>>, %arg2: memref<8x32xf32, #tpu.memory_space<vmem>>, %arg3: memref<32x192xf32, #tpu.memory_space<vmem>>, %arg4: memref<1x192xf32, #tpu.memory_space<vmem>>, %arg5: memref<64x32xf32, #tpu.memory_space<vmem>>, %arg6: memref<1x32xf32, #tpu.memory_space<vmem>>, %arg7: memref<32x64xf32, #tpu.memory_space<vmem>>, %arg8: memref<1x64xf32, #tpu.memory_space<vmem>>, %arg9: memref<64x32xf32, #tpu.memory_space<vmem>>, %arg10: memref<1x32xf32, #tpu.memory_space<vmem>>, %arg11: memref<2x8x8xi8, #tpu.memory_space<vmem>>, %arg12: memref<16x32xf32, #tpu.memory_space<vmem>>) attributes {dimension_semantics = [#tpu.dimension_semantics<parallel>], iteration_bounds = array<i64: 1>, scalar_prefetch = 0 : i64, scratch_operands = 0 : i64, tpu.core_type = #tpu.core_type<tc>, window_params = [{transform_indices = @transform_0, window_bounds = array<i64: 2, 8, 32>}, {pipeline_mode = #tpu.pipeline_mode<synchronous>, transform_indices = @transform_1, window_bounds = array<i64: 8, 32>}, {pipeline_mode = #tpu.pipeline_mode<synchronous>, transform_indices = @transform_2, window_bounds = array<i64: 32, 192>}, {pipeline_mode = #tpu.pipeline_mode<synchronous>, transform_indices = @transform_3, window_bounds = array<i64: 1, 192>}, {pipeline_mode = #tpu.pipeline_mode<synchronous>, transform_indices = @transform_4, window_bounds = array<i64: 64, 32>}, {pipeline_mode = #tpu.pipeline_mode<synchronous>, transform_indices = @transform_5, window_bounds = array<i64: 1, 32>}, {pipeline_mode = #tpu.pipeline_mode<synchronous>, transform_indices = @transform_6, window_bounds = array<i64: 32, 64>}, {pipeline_mode = #tpu.pipeline_mode<synchronous>, transform_indices = @transform_7, window_bounds = array<i64: 1, 64>}, {pipeline_mode = #tpu.pipeline_mode<synchronous>, transform_indices = @transform_8, window_bounds = array<i64: 64, 32>}, {pipeline_mode = #tpu.pipeline_mode<synchronous>, transform_indices = @transform_9, window_bounds = array<i64: 1, 32>}, {transform_indices = @transform_10, window_bounds = array<i64: 2, 8, 8>}, {transform_indices = @transform_11, window_bounds = array<i64: 16, 32>}]} {
    %c0 = arith.constant 0 : index
    %c0_0 = arith.constant 0 : index
    %c0_1 = arith.constant 0 : index
    %0 = vector.load %arg1[%c0, %c0_0, %c0_1] : memref<2x8x32xf32, #tpu.memory_space<vmem>>, vector<2x8x32xf32>
    %cst = arith.constant 5.65685415 : f32
    %1 = vector.broadcast %cst : f32 to vector<2x8x32xf32>
    %2 = arith.mulf %0, %1 : vector<2x8x32xf32>
    %c0_2 = arith.constant 0 : index
    %c0_3 = arith.constant 0 : index
    %3 = vector.load %arg2[%c0_2, %c0_3] : memref<8x32xf32, #tpu.memory_space<vmem>>, vector<8x32xf32>
    %4 = vector.shape_cast %3 : vector<8x32xf32> to vector<1x8x32xf32>
    %5 = vector.broadcast %4 : vector<1x8x32xf32> to vector<2x8x32xf32>
    %6 = arith.addf %2, %5 : vector<2x8x32xf32>
    %7 = vector.shape_cast %6 : vector<2x8x32xf32> to vector<16x32xf32>
    %c0_4 = arith.constant 0 : index
    %c0_5 = arith.constant 0 : index
    %8 = vector.load %arg3[%c0_4, %c0_5] : memref<32x192xf32, #tpu.memory_space<vmem>>, vector<32x192xf32>
    %cst_6 = arith.constant dense<0.000000e+00> : vector<16x192xf32>
    %9 = tpu.matmul %7, %8, %cst_6 {dimension_numbers = #tpu.dot_dimension_numbers<[1], [0], [0], [1], [0, 0, 1, 1], [], []>} : vector<16x32xf32>, vector<32x192xf32>, vector<16x192xf32> -> vector<16x192xf32>
    %c0_7 = arith.constant 0 : index
    %c0_8 = arith.constant 0 : index
    %10 = vector.load %arg4[%c0_7, %c0_8] : memref<1x192xf32, #tpu.memory_space<vmem>>, vector<1x192xf32>
    %11 = vector.broadcast %10 : vector<1x192xf32> to vector<16x192xf32>
    %12 = arith.addf %9, %11 : vector<16x192xf32>
    %c0_9 = arith.constant 0 : index
    %c0_10 = arith.constant 0 : index
    %c0_11 = arith.constant 0 : index
    %13 = vector.load %arg11[%c0_9, %c0_10, %c0_11] : memref<2x8x8xi8, #tpu.memory_space<vmem>>, vector<2x8x8xi8>
    %c0_i8 = arith.constant 0 : i8
    %14 = vector.broadcast %c0_i8 : i8 to vector<2x8x8xi8>
    %15 = arith.cmpi ne, %13, %14 : vector<2x8x8xi8>
    %16 = vector.extract_strided_slice %12 {offsets = [0, 0], sizes = [16, 32], strides = [1, 1]} : vector<16x192xf32> to vector<16x32xf32>
    %17 = vector.shape_cast %16 : vector<16x32xf32> to vector<2x8x32xf32>
    %18 = vector.extract_strided_slice %12 {offsets = [0, 64], sizes = [16, 32], strides = [1, 1]} : vector<16x192xf32> to vector<16x32xf32>
    %19 = vector.shape_cast %18 : vector<16x32xf32> to vector<2x8x32xf32>
    %20 = vector.extract_strided_slice %12 {offsets = [0, 128], sizes = [16, 32], strides = [1, 1]} : vector<16x192xf32> to vector<16x32xf32>
    %21 = vector.shape_cast %20 : vector<16x32xf32> to vector<2x8x32xf32>
    "tpu.trace_start"() <{level = 10 : i32, message = "bqd,bkd->bqk"}> : () -> ()
    %cst_12 = arith.constant dense<0.000000e+00> : vector<2x8x8xf32>
    %22 = tpu.matmul %17, %19, %cst_12 {dimension_numbers = #tpu.dot_dimension_numbers<[2], [2], [1], [1], [0, 0, 0, 1, 1, 1], [0], [0]>} : vector<2x8x32xf32>, vector<2x8x32xf32>, vector<2x8x8xf32> -> vector<2x8x8xf32>
    %cst_13 = arith.constant -1.000000e+09 : f32
    "tpu.trace_stop"() : () -> ()
    %23 = vector.broadcast %cst_13 : f32 to vector<2x8x8xf32>
    %24 = arith.select %15, %22, %23 : vector<2x8x8xi1>, vector<2x8x8xf32>
    %cst_14 = arith.constant dense<0xFF800000> : vector<2x8xf32>
    %25 = vector.multi_reduction <maximumf>, %24, %cst_14 [2] : vector<2x8x8xf32> to vector<2x8xf32>
    %26 = vector.shape_cast %25 : vector<2x8xf32> to vector<2x8x1xf32>
    %27 = vector.broadcast %26 : vector<2x8x1xf32> to vector<2x8x8xf32>
    %28 = arith.subf %24, %27 : vector<2x8x8xf32>
    %29 = math.exp %28 : vector<2x8x8xf32>
    %cst_15 = arith.constant dense<0.000000e+00> : vector<2x8xf32>
    %30 = vector.multi_reduction <add>, %29, %cst_15 [2] : vector<2x8x8xf32> to vector<2x8xf32>
    %31 = vector.shape_cast %30 : vector<2x8xf32> to vector<2x8x1xf32>
    %32 = tpu.reciprocal %31 : vector<2x8x1xf32> -> vector<2x8x1xf32>
    %33 = vector.broadcast %32 : vector<2x8x1xf32> to vector<2x8x8xf32>
    %34 = arith.mulf %29, %33 : vector<2x8x8xf32>
    "tpu.trace_start"() <{level = 10 : i32, message = "bqk,bkd->bqd"}> : () -> ()
    %cst_16 = arith.constant dense<0.000000e+00> : vector<2x8x32xf32>
    %35 = tpu.matmul %34, %21, %cst_16 {dimension_numbers = #tpu.dot_dimension_numbers<[2], [1], [1], [2], [0, 0, 0, 1, 1, 2], [0], [0]>} : vector<2x8x8xf32>, vector<2x8x32xf32>, vector<2x8x32xf32> -> vector<2x8x32xf32>
    "tpu.trace_stop"() : () -> ()
    %36 = vector.shape_cast %35 : vector<2x8x32xf32> to vector<16x32xf32>
    %37 = vector.extract_strided_slice %12 {offsets = [0, 32], sizes = [16, 32], strides = [1, 1]} : vector<16x192xf32> to vector<16x32xf32>
    %38 = vector.shape_cast %37 : vector<16x32xf32> to vector<2x8x32xf32>
    %39 = vector.extract_strided_slice %12 {offsets = [0, 96], sizes = [16, 32], strides = [1, 1]} : vector<16x192xf32> to vector<16x32xf32>
    %40 = vector.shape_cast %39 : vector<16x32xf32> to vector<2x8x32xf32>
    %41 = vector.extract_strided_slice %12 {offsets = [0, 160], sizes = [16, 32], strides = [1, 1]} : vector<16x192xf32> to vector<16x32xf32>
    %42 = vector.shape_cast %41 : vector<16x32xf32> to vector<2x8x32xf32>
    "tpu.trace_start"() <{level = 10 : i32, message = "bqd,bkd->bqk"}> : () -> ()
    %cst_17 = arith.constant dense<0.000000e+00> : vector<2x8x8xf32>
    %43 = tpu.matmul %38, %40, %cst_17 {dimension_numbers = #tpu.dot_dimension_numbers<[2], [2], [1], [1], [0, 0, 0, 1, 1, 1], [0], [0]>} : vector<2x8x32xf32>, vector<2x8x32xf32>, vector<2x8x8xf32> -> vector<2x8x8xf32>
    %cst_18 = arith.constant -1.000000e+09 : f32
    "tpu.trace_stop"() : () -> ()
    %44 = vector.broadcast %cst_18 : f32 to vector<2x8x8xf32>
    %45 = arith.select %15, %43, %44 : vector<2x8x8xi1>, vector<2x8x8xf32>
    %cst_19 = arith.constant dense<0xFF800000> : vector<2x8xf32>
    %46 = vector.multi_reduction <maximumf>, %45, %cst_19 [2] : vector<2x8x8xf32> to vector<2x8xf32>
    %47 = vector.shape_cast %46 : vector<2x8xf32> to vector<2x8x1xf32>
    %48 = vector.broadcast %47 : vector<2x8x1xf32> to vector<2x8x8xf32>
    %49 = arith.subf %45, %48 : vector<2x8x8xf32>
    %50 = math.exp %49 : vector<2x8x8xf32>
    %cst_20 = arith.constant dense<0.000000e+00> : vector<2x8xf32>
    %51 = vector.multi_reduction <add>, %50, %cst_20 [2] : vector<2x8x8xf32> to vector<2x8xf32>
    %52 = vector.shape_cast %51 : vector<2x8xf32> to vector<2x8x1xf32>
    %53 = tpu.reciprocal %52 : vector<2x8x1xf32> -> vector<2x8x1xf32>
    %54 = vector.broadcast %53 : vector<2x8x1xf32> to vector<2x8x8xf32>
    %55 = arith.mulf %50, %54 : vector<2x8x8xf32>
    "tpu.trace_start"() <{level = 10 : i32, message = "bqk,bkd->bqd"}> : () -> ()
    %cst_21 = arith.constant dense<0.000000e+00> : vector<2x8x32xf32>
    %56 = tpu.matmul %55, %42, %cst_21 {dimension_numbers = #tpu.dot_dimension_numbers<[2], [1], [1], [2], [0, 0, 0, 1, 1, 2], [0], [0]>} : vector<2x8x8xf32>, vector<2x8x32xf32>, vector<2x8x32xf32> -> vector<2x8x32xf32>
    "tpu.trace_stop"() : () -> ()
    %57 = vector.shape_cast %56 : vector<2x8x32xf32> to vector<16x32xf32>
    %58 = tpu.concatenate %36, %57 in 1 : vector<16x32xf32>, vector<16x32xf32> -> vector<16x64xf32>
    %c0_22 = arith.constant 0 : index
    %c0_23 = arith.constant 0 : index
    %59 = vector.load %arg5[%c0_22, %c0_23] : memref<64x32xf32, #tpu.memory_space<vmem>>, vector<64x32xf32>
    %cst_24 = arith.constant dense<0.000000e+00> : vector<16x32xf32>
    %60 = tpu.matmul %58, %59, %cst_24 {dimension_numbers = #tpu.dot_dimension_numbers<[1], [0], [0], [1], [0, 0, 1, 1], [], []>} : vector<16x64xf32>, vector<64x32xf32>, vector<16x32xf32> -> vector<16x32xf32>
    %c0_25 = arith.constant 0 : index
    %c0_26 = arith.constant 0 : index
    %61 = vector.load %arg6[%c0_25, %c0_26] : memref<1x32xf32, #tpu.memory_space<vmem>>, vector<1x32xf32>
    %62 = vector.broadcast %61 : vector<1x32xf32> to vector<16x32xf32>
    %63 = arith.addf %60, %62 : vector<16x32xf32>
    %c0_27 = arith.constant 0 : index
    %c0_28 = arith.constant 0 : index
    %64 = vector.load %arg7[%c0_27, %c0_28] : memref<32x64xf32, #tpu.memory_space<vmem>>, vector<32x64xf32>
    %cst_29 = arith.constant dense<0.000000e+00> : vector<16x64xf32>
    %65 = tpu.matmul %63, %64, %cst_29 {dimension_numbers = #tpu.dot_dimension_numbers<[1], [0], [0], [1], [0, 0, 1, 1], [], []>} : vector<16x32xf32>, vector<32x64xf32>, vector<16x64xf32> -> vector<16x64xf32>
    %c0_30 = arith.constant 0 : index
    %c0_31 = arith.constant 0 : index
    %66 = vector.load %arg8[%c0_30, %c0_31] : memref<1x64xf32, #tpu.memory_space<vmem>>, vector<1x64xf32>
    %67 = vector.broadcast %66 : vector<1x64xf32> to vector<16x64xf32>
    %68 = arith.addf %65, %67 : vector<16x64xf32>
    %cst_32 = arith.constant 0.000000e+00 : f32
    %69 = vector.broadcast %cst_32 : f32 to vector<16x64xf32>
    %70 = arith.maximumf %68, %69 : vector<16x64xf32>
    %c0_33 = arith.constant 0 : index
    %c0_34 = arith.constant 0 : index
    %71 = vector.load %arg9[%c0_33, %c0_34] : memref<64x32xf32, #tpu.memory_space<vmem>>, vector<64x32xf32>
    %cst_35 = arith.constant dense<0.000000e+00> : vector<16x32xf32>
    %72 = tpu.matmul %70, %71, %cst_35 {dimension_numbers = #tpu.dot_dimension_numbers<[1], [0], [0], [1], [0, 0, 1, 1], [], []>} : vector<16x64xf32>, vector<64x32xf32>, vector<16x32xf32> -> vector<16x32xf32>
    %c0_36 = arith.constant 0 : index
    %c0_37 = arith.constant 0 : index
    %73 = vector.load %arg10[%c0_36, %c0_37] : memref<1x32xf32, #tpu.memory_space<vmem>>, vector<1x32xf32>
    %74 = vector.broadcast %73 : vector<1x32xf32> to vector<16x32xf32>
    %75 = arith.addf %72, %74 : vector<16x32xf32>
    %c0_38 = arith.constant 0 : index
    %c0_39 = arith.constant 0 : index
    %76 = vector.load %arg12[%c0_38, %c0_39] : memref<16x32xf32, #tpu.memory_space<vmem>>, vector<16x32xf32>
    tpu.vector_store %arg12[%c0_38, %c0_39], %75 {strides = array<i32>} : memref<16x32xf32, #tpu.memory_space<vmem>>, vector<16x32xf32>,
    return
  }
  func.func @transform_0(%arg0: i32) -> (i32, i32, i32) {
    %c0_i32 = arith.constant 0 : i32
    %c0_i32_0 = arith.constant 0 : i32
    %c0_i32_1 = arith.constant 0 : i32
    return %arg0, %c0_i32, %c0_i32_0 : i32, i32, i32
  }
  func.func @transform_1(%arg0: i32) -> (i32, i32) {
    %c0_i32 = arith.constant 0 : i32
    %c0_i32_0 = arith.constant 0 : i32
    %c0_i32_1 = arith.constant 0 : i32
    return %c0_i32, %c0_i32_0 : i32, i32
  }
  func.func @transform_2(%arg0: i32) -> (i32, i32) {
    %c0_i32 = arith.constant 0 : i32
    %c0_i32_0 = arith.constant 0 : i32
    %c0_i32_1 = arith.constant 0 : i32
    return %c0_i32, %c0_i32_0 : i32, i32
  }
  func.func @transform_3(%arg0: i32) -> (i32, i32) {
    %c0_i32 = arith.constant 0 : i32
    %c0_i32_0 = arith.constant 0 : i32
    %c0_i32_1 = arith.constant 0 : i32
    return %c0_i32, %c0_i32_0 : i32, i32
  }
  func.func @transform_4(%arg0: i32) -> (i32, i32) {
    %c0_i32 = arith.constant 0 : i32
    %c0_i32_0 = arith.constant 0 : i32
    %c0_i32_1 = arith.constant 0 : i32
    return %c0_i32, %c0_i32_0 : i32, i32
  }
  func.func @transform_5(%arg0: i32) -> (i32, i32) {
    %c0_i32 = arith.constant 0 : i32
    %c0_i32_0 = arith.constant 0 : i32
    %c0_i32_1 = arith.constant 0 : i32
    return %c0_i32, %c0_i32_0 : i32, i32
  }
  func.func @transform_6(%arg0: i32) -> (i32, i32) {
    %c0_i32 = arith.constant 0 : i32
    %c0_i32_0 = arith.constant 0 : i32
    %c0_i32_1 = arith.constant 0 : i32
    return %c0_i32, %c0_i32_0 : i32, i32
  }
  func.func @transform_7(%arg0: i32) -> (i32, i32) {
    %c0_i32 = arith.constant 0 : i32
    %c0_i32_0 = arith.constant 0 : i32
    %c0_i32_1 = arith.constant 0 : i32
    return %c0_i32, %c0_i32_0 : i32, i32
  }
  func.func @transform_8(%arg0: i32) -> (i32, i32) {
    %c0_i32 = arith.constant 0 : i32
    %c0_i32_0 = arith.constant 0 : i32
    %c0_i32_1 = arith.constant 0 : i32
    return %c0_i32, %c0_i32_0 : i32, i32
  }
  func.func @transform_9(%arg0: i32) -> (i32, i32) {
    %c0_i32 = arith.constant 0 : i32
    %c0_i32_0 = arith.constant 0 : i32
    %c0_i32_1 = arith.constant 0 : i32
    return %c0_i32, %c0_i32_0 : i32, i32
  }
  func.func @transform_10(%arg0: i32) -> (i32, i32, i32) {
    %c0_i32 = arith.constant 0 : i32
    %c0_i32_0 = arith.constant 0 : i32
    %c0_i32_1 = arith.constant 0 : i32
    return %arg0, %c0_i32, %c0_i32_0 : i32, i32, i32
  }
  func.func @transform_11(%arg0: i32) -> (i32, i32) {
    %c0_i32 = arith.constant 0 : i32
    %c0_i32_0 = arith.constant 0 : i32
    return %arg0, %c0_i32 : i32, i32
  }
}

</mosaic_0001>

<llo_original>
// kernel: tpu_custom_call.1
$region0: #{tpu_custom_call.1}
  #allocation0 [shape = 'u32[]', space=smem, size = 0x4, offset = 0x4, fixed_abs, tag = 'smem constant byte address 0x4 - core index']
  #allocation1 [shape = 'u32[144,128]{1,0:T(1,128)}', space=vmem, size = 0x12000, scoped, tag = 'internal scratch']
  %s0 = inlined_call_operand.vmem [shape: f32[2,8,32], index: 0, kind: input, shape index: {}]
  %s1 = inlined_call_operand.vmem [shape: f32[8,32], index: 1, kind: input, shape index: {}]
  %s2 = inlined_call_operand.vmem [shape: f32[32,192], index: 2, kind: input, shape index: {}]
  %s3 = inlined_call_operand.vmem [shape: f32[1,192], index: 3, kind: input, shape index: {}]
  %s4 = inlined_call_operand.vmem [shape: f32[64,32], index: 4, kind: input, shape index: {}]
  %s5 = inlined_call_operand.vmem [shape: f32[1,32], index: 5, kind: input, shape index: {}]
  %s6 = inlined_call_operand.vmem [shape: f32[32,64], index: 6, kind: input, shape index: {}]
  %s7 = inlined_call_operand.vmem [shape: f32[1,64], index: 7, kind: input, shape index: {}]
  %s8 = inlined_call_operand.vmem [shape: f32[64,32], index: 8, kind: input, shape index: {}]
  %s9 = inlined_call_operand.vmem [shape: f32[1,32], index: 9, kind: input, shape index: {}]
  %s10 = inlined_call_operand.vmem [shape: s8[2,8,8], index: 10, kind: input, shape index: {}]
  %s11 = inlined_call_operand.hbm [shape: f32[16,32], index: 11, kind: output, shape index: {}]
  %s12 = sld [smem:[#allocation0]]
  $region54: #{tpu_custom_call.1} parent=0
    _
  %s14 = ssub.s32 1, %s12
  %s15 = scalar_select 0, %s14, %s12
  $region1: #{tpu_custom_call.1} parent=0
    #allocation2 [shape = 'u8[8192]{0}', space=vmem, size = 0x2000, scoped, tag = 'output window, operand 0, single buffered']
    #allocation3 [shape = 's32[1]{0}', space=sflag, size = 0x4, scoped, tag = 'scoped memory for tpu_custom_call.1']
    %16 = vsyncpa [#allocation3], 0
    // Predicated region
    $region2: #{tpu_custom_call.1} parent=1 // pred_check
      _
    $region3: #{tpu_custom_call.1} parent=1 // pred_check_branch
      %18 = sbr.rel (0) target = $region5
    $region4: #{tpu_custom_call.1} parent=1 // pred_region
      _
    $region5: #{tpu_custom_call.1} parent=1 // pred_fallthru
      _
    // Predicated region
    $region6: #{tpu_custom_call.1} parent=1 // pred_check
      _
    $region7: #{tpu_custom_call.1} parent=1 // pred_check_branch
      %20 = sbr.rel (0) target = $region9
    $region8: #{tpu_custom_call.1} parent=1 // pred_region
      _
    $region9: #{tpu_custom_call.1} parent=1 // pred_fallthru
      _
    // Predicated region
    $region10: #{tpu_custom_call.1} parent=1 // pred_check
      _
    $region11: #{tpu_custom_call.1} parent=1 // pred_check_branch
      %22 = sbr.rel (0) target = $region13
    $region12: #{tpu_custom_call.1} parent=1 // pred_region
      _
    $region13: #{tpu_custom_call.1} parent=1 // pred_fallthru
      _
    // Predicated region
    $region14: #{tpu_custom_call.1} parent=1 // pred_check
      _
    $region15: #{tpu_custom_call.1} parent=1 // pred_check_branch
      %24 = sbr.rel (0) target = $region17
    $region16: #{tpu_custom_call.1} parent=1 // pred_region
      _
    $region17: #{tpu_custom_call.1} parent=1 // pred_fallthru
      _
    // Predicated region
    $region18: #{tpu_custom_call.1} parent=1 // pred_check
      _
    $region19: #{tpu_custom_call.1} parent=1 // pred_check_branch
      %26 = sbr.rel (0) target = $region21
    $region20: #{tpu_custom_call.1} parent=1 // pred_region
      _
    $region21: #{tpu_custom_call.1} parent=1 // pred_fallthru
      _
    // Predicated region
    $region22: #{tpu_custom_call.1} parent=1 // pred_check
      _
    $region23: #{tpu_custom_call.1} parent=1 // pred_check_branch
      %28 = sbr.rel (0) target = $region25
    $region24: #{tpu_custom_call.1} parent=1 // pred_region
      _
    $region25: #{tpu_custom_call.1} parent=1 // pred_fallthru
      _
    // Predicated region
    $region26: #{tpu_custom_call.1} parent=1 // pred_check
      _
    $region27: #{tpu_custom_call.1} parent=1 // pred_check_branch
      %30 = sbr.rel (0) target = $region29
    $region28: #{tpu_custom_call.1} parent=1 // pred_region
      _
    $region29: #{tpu_custom_call.1} parent=1 // pred_fallthru
      _
    // Predicated region
    $region30: #{tpu_custom_call.1} parent=1 // pred_check
      _
    $region31: #{tpu_custom_call.1} parent=1 // pred_check_branch
      %32 = sbr.rel (0) target = $region33
    $region32: #{tpu_custom_call.1} parent=1 // pred_region
      _
    $region33: #{tpu_custom_call.1} parent=1 // pred_fallthru
      _
    // Predicated region
    $region34: #{tpu_custom_call.1} parent=1 // pred_check
      _
    $region35: #{tpu_custom_call.1} parent=1 // pred_check_branch
      %34 = sbr.rel (0) target = $region37
    $region36: #{tpu_custom_call.1} parent=1 // pred_region
      _
    $region37: #{tpu_custom_call.1} parent=1 // pred_fallthru
      _
    // Predicated region
    $region38: #{tpu_custom_call.1} parent=1 // pred_check
      _
    $region39: #{tpu_custom_call.1} parent=1 // pred_check_branch
      %36 = sbr.rel (0) target = $region41
    $region40: #{tpu_custom_call.1} parent=1 // pred_region
      _
    $region41: #{tpu_custom_call.1} parent=1 // pred_fallthru
      _
    // Predicated region
    $region42: #{tpu_custom_call.1} parent=1 // pred_check
      _
    $region43: #{tpu_custom_call.1} parent=1 // pred_check_branch
      %38 = sbr.rel (0) target = $region45
    $region44: #{tpu_custom_call.1} parent=1 // pred_region
      _
    $region45: #{tpu_custom_call.1} parent=1 // pred_fallthru
      _
    %v41 = vld [vmem:[%s0] sm:$0xff]
    %v42 = vld [vmem:[%s0 + $0x8] sm:$0xff]
    %v43 = vmul.f32 %v41, 5.656854
    %v44 = vmul.f32 %v42, 5.656854
    %v45 = vld [vmem:[%s1] sm:$0xff]
    %v46 = vadd.f32 %v43, %v45
    %v47 = vadd.f32 %v44, %v45
    %v48 = vld [vmem:[%s2] sm:$0xff]
    %v49 = vld [vmem:[%s2 + $0x8] sm:$0xff]
    %v50 = vld [vmem:[%s2 + $0x10] sm:$0xff]
    %v51 = vld [vmem:[%s2 + $0x18] sm:$0xff]
    %v52 = vld [vmem:[%s2 + $0x20] sm:$0xff]
    %v53 = vld [vmem:[%s2 + $0x28] sm:$0xff]
    %v54 = vld [vmem:[%s2 + $0x30] sm:$0xff]
    %v55 = vld [vmem:[%s2 + $0x38] sm:$0xff]
    %v56 = vld [vmem:[%s3] sm:$0x3]
    %v58 = vlaneseq
    %v59 = vshrl.u32 %v58, 7
    %v60 = vsub.s32 0, %v59
    %v61 = vrot.slane %v56, %v60
    %v62 = vlaneseq
    %v63 = vshrl.u32 %v62, 7
    %v64 = vsub.s32 1, %v63
    %v65 = vrot.slane %v56, %v64
    %vm68 = vcmask 261120
    %v70 = vsel %vm68, %v46, 0
    %v73 = vsel %vm68, %v47, 0
    %75 = vmatprep.subr.mxu0 %v49
    %76 = vmatpush1.msra.mxu0 %v48
    %77 = vmatprep.subr.mxu0 %v51
    %78 = vmatpush1.msra.mxu0 %v50
    %79 = vmatprep.subr.mxu0 %v53
    %80 = vmatpush1.msra.mxu0 %v52
    %81 = vmatprep.subr.mxu0 %v55
    %82 = vmatpush1.msra.mxu0 %v54
    %83 = vmatprep.subr.mxu0 0.0
    %84 = vmatpush1.msra.mxu0 0.0
    %85 = vmatprep.subr.mxu0 0.0
    %86 = vmatpush1.msra.mxu0 0.0
    %87 = vmatprep.subr.mxu0 0.0
    %88 = vmatpush1.msra.mxu0 0.0
    %89 = vmatprep.subr.mxu0 0.0
    %90 = vmatpush1.msra.mxu0 0.0
    %91 = vmatprep.subr.mxu0 0.0
    %92 = vmatpush1.msra.mxu0 0.0
    %93 = vmatprep.subr.mxu0 0.0
    %94 = vmatpush1.msra.mxu0 0.0
    %95 = vmatprep.subr.mxu0 0.0
    %96 = vmatpush1.msra.mxu0 0.0
    %97 = vmatprep.subr.mxu0 0.0
    %98 = vmatpush1.msra.mxu0 0.0
    %99 = vmatprep.subr.mxu0 0.0
    %100 = vmatpush1.msra.mxu0 0.0
    %101 = vmatprep.subr.mxu0 0.0
    %102 = vmatpush1.msra.mxu0 0.0
    %103 = vmatprep.subr.mxu0 0.0
    %104 = vmatpush1.msra.mxu0 0.0
    %105 = vmatprep.subr.mxu0 0.0
    %106 = vmatpush1.msra.mxu0 0.0
    %107 = vmatprep.subr.mxu0 0.0
    %108 = vmatpush1.msra.mxu0 0.0
    %109 = vmatprep.subr.mxu0 0.0
    %110 = vmatpush1.msra.mxu0 0.0
    %111 = vmatprep.subr.mxu0 0.0
    %112 = vmatpush1.msra.mxu0 0.0
    %113 = vmatprep.subr.mxu0 0.0
    %114 = vmatpush1.msra.mxu0 0.0
    %115 = vmatprep.subr.mxu0 0.0
    %116 = vmatpush1.msra.mxu0 0.0
    %117 = vmatprep.subr.mxu0 0.0
    %118 = vmatpush1.msra.mxu0 0.0
    %119 = vmatprep.subr.mxu0 0.0
    %120 = vmatpush1.msra.mxu0 0.0
    %121 = vmatprep.subr.mxu0 0.0
    %122 = vmatpush1.msra.mxu0 0.0
    %123 = vmatprep.subr.mxu0 0.0
    %124 = vmatpush1.msra.mxu0 0.0
    %125 = vmatprep.subr.mxu0 0.0
    %126 = vmatpush1.msra.mxu0 0.0
    %127 = vmatprep.subr.mxu0 0.0
    %128 = vmatpush1.msra.mxu0 0.0
    %129 = vmatprep.subr.mxu0 0.0
    %130 = vmatpush1.msra.mxu0 0.0
    %131 = vmatprep.subr.mxu0 0.0
    %132 = vmatpush1.msra.mxu0 0.0
    %133 = vmatprep.subr.mxu0 0.0
    %134 = vmatpush1.msra.mxu0 0.0
    %135 = vmatprep.subr.mxu0 0.0
    %136 = vmatpush1.msra.mxu0 0.0
    %137 = vmatprep.subr.mxu0 0.0
    %138 = vmatpush1.msra.mxu0 0.0
    %139 = vmatprep.mubr.f32.mxu0 0.0
    %140 = vmatmul.mubr.f32.gmra.mrb[0].mxu0 %v70
    %v141 = vpop.f32.mrb[0].mxu0
    %v142 = vadd.f32 %v61, %v141
    %v143 = vpop.f32.mrb[0].mxu0
    %v144 = vadd.f32 %v65, %v143
    %145 = vmatprep.mubr.f32.mxu0 0.0
    %146 = vmatmul.mubr.f32.gmra.mrb[0].mxu0 %v73
    %v147 = vpop.f32.mrb[0].mxu0
    %v148 = vadd.f32 %v61, %v147
    %v149 = vpop.f32.mrb[0].mxu0
    %v150 = vadd.f32 %v65, %v149
    %151 = vdwg.mxu0
    %v152 = vld [vmem:[%s10] sm:$0x3]
    %v153 = vld [vmem:[%s10 + $0x2] sm:$0x3]
    %vm154 = vnez %v152
    %vm155 = vnez %v153
    %157 = vrot.lane.b32.xlu0 %v142, 64
    %v158 = vpop.permute.xlu0 %157
    %v159 = vsel %vm68, %v142, 0
    %v161 = vsel %vm68, %v158, 0
    %163 = vmatprep.subr.mxu0 0.0
    %164 = vmatpush1.xpose.msra.mxu0 %v161
    %165 = vmatprep.subr.mxu0 0.0
    %166 = vmatpush1.xpose.msra.mxu0 0.0
    %167 = vmatprep.subr.mxu0 0.0
    %168 = vmatpush1.xpose.msra.mxu0 0.0
    %169 = vmatprep.subr.mxu0 0.0
    %170 = vmatpush1.xpose.msra.mxu0 0.0
    %171 = vmatprep.subr.mxu0 0.0
    %172 = vmatpush1.xpose.msra.mxu0 0.0
    %173 = vmatprep.subr.mxu0 0.0
    %174 = vmatpush1.xpose.msra.mxu0 0.0
    %175 = vmatprep.subr.mxu0 0.0
    %176 = vmatpush1.xpose.msra.mxu0 0.0
    %177 = vmatprep.subr.mxu0 0.0
    %178 = vmatpush1.xpose.msra.mxu0 0.0
    %179 = vmatprep.subr.mxu0 0.0
    %180 = vmatpush1.xpose.msra.mxu0 0.0
    %181 = vmatprep.subr.mxu0 0.0
    %182 = vmatpush1.xpose.msra.mxu0 0.0
    %183 = vmatprep.subr.mxu0 0.0
    %184 = vmatpush1.xpose.msra.mxu0 0.0
    %185 = vmatprep.subr.mxu0 0.0
    %186 = vmatpush1.xpose.msra.mxu0 0.0
    %187 = vmatprep.subr.mxu0 0.0
    %188 = vmatpush1.xpose.msra.mxu0 0.0
    %189 = vmatprep.subr.mxu0 0.0
    %190 = vmatpush1.xpose.msra.mxu0 0.0
    %191 = vmatprep.subr.mxu0 0.0
    %192 = vmatpush1.xpose.msra.mxu0 0.0
    %193 = vmatprep.subr.mxu0 0.0
    %194 = vmatpush1.xpose.msra.mxu0 0.0
    %195 = vmatprep.subr.mxu0 0.0
    %196 = vmatpush1.xpose.msra.mxu0 0.0
    %197 = vmatprep.subr.mxu0 0.0
    %198 = vmatpush1.xpose.msra.mxu0 0.0
    %199 = vmatprep.subr.mxu0 0.0
    %200 = vmatpush1.xpose.msra.mxu0 0.0
    %201 = vmatprep.subr.mxu0 0.0
    %202 = vmatpush1.xpose.msra.mxu0 0.0
    %203 = vmatprep.subr.mxu0 0.0
    %204 = vmatpush1.xpose.msra.mxu0 0.0
    %205 = vmatprep.subr.mxu0 0.0
    %206 = vmatpush1.xpose.msra.mxu0 0.0
    %207 = vmatprep.subr.mxu0 0.0
    %208 = vmatpush1.xpose.msra.mxu0 0.0
    %209 = vmatprep.subr.mxu0 0.0
    %210 = vmatpush1.xpose.msra.mxu0 0.0
    %211 = vmatprep.subr.mxu0 0.0
    %212 = vmatpush1.xpose.msra.mxu0 0.0
    %213 = vmatprep.subr.mxu0 0.0
    %214 = vmatpush1.xpose.msra.mxu0 0.0
    %215 = vmatprep.subr.mxu0 0.0
    %216 = vmatpush1.xpose.msra.mxu0 0.0
    %217 = vmatprep.subr.mxu0 0.0
    %218 = vmatpush1.xpose.msra.mxu0 0.0
    %219 = vmatprep.subr.mxu0 0.0
    %220 = vmatpush1.xpose.msra.mxu0 0.0
    %221 = vmatprep.subr.mxu0 0.0
    %222 = vmatpush1.xpose.msra.mxu0 0.0
    %223 = vmatprep.subr.mxu0 0.0
    %224 = vmatpush1.xpose.msra.mxu0 0.0
    %225 = vmatprep.subr.mxu0 0.0
    %226 = vmatpush1.xpose.msra.mxu0 0.0
    %227 = vmatprep.mubr.f32.mxu0 0.0
    %228 = vmatmul.mubr.f32.gmra.mrb[0].mxu0 %v159
    %v229 = vpop.f32.mrb[0].mxu0
    %v230 = vadd.f32 0.0, %v229
    %v231 = vpop.f32.mrb[0].mxu0
    %232 = vdwg.mxu0
    %234 = vrot.lane.b32.xlu0 %v148, 64
    %v235 = vpop.permute.xlu0 %234
    %v236 = vsel %vm68, %v148, 0
    %v238 = vsel %vm68, %v235, 0
    %240 = vmatprep.subr.mxu0 0.0
    %241 = vmatpush1.xpose.msra.mxu0 %v238
    %242 = vmatprep.subr.mxu0 0.0
    %243 = vmatpush1.xpose.msra.mxu0 0.0
    %244 = vmatprep.subr.mxu0 0.0
    %245 = vmatpush1.xpose.msra.mxu0 0.0
    %246 = vmatprep.subr.mxu0 0.0
    %247 = vmatpush1.xpose.msra.mxu0 0.0
    %248 = vmatprep.subr.mxu0 0.0
    %249 = vmatpush1.xpose.msra.mxu0 0.0
    %250 = vmatprep.subr.mxu0 0.0
    %251 = vmatpush1.xpose.msra.mxu0 0.0
    %252 = vmatprep.subr.mxu0 0.0
    %253 = vmatpush1.xpose.msra.mxu0 0.0
    %254 = vmatprep.subr.mxu0 0.0
    %255 = vmatpush1.xpose.msra.mxu0 0.0
    %256 = vmatprep.subr.mxu0 0.0
    %257 = vmatpush1.xpose.msra.mxu0 0.0
    %258 = vmatprep.subr.mxu0 0.0
    %259 = vmatpush1.xpose.msra.mxu0 0.0
    %260 = vmatprep.subr.mxu0 0.0
    %261 = vmatpush1.xpose.msra.mxu0 0.0
    %262 = vmatprep.subr.mxu0 0.0
    %263 = vmatpush1.xpose.msra.mxu0 0.0
    %264 = vmatprep.subr.mxu0 0.0
    %265 = vmatpush1.xpose.msra.mxu0 0.0
    %266 = vmatprep.subr.mxu0 0.0
    %267 = vmatpush1.xpose.msra.mxu0 0.0
    %268 = vmatprep.subr.mxu0 0.0
    %269 = vmatpush1.xpose.msra.mxu0 0.0
    %270 = vmatprep.subr.mxu0 0.0
    %271 = vmatpush1.xpose.msra.mxu0 0.0
    %272 = vmatprep.subr.mxu0 0.0
    %273 = vmatpush1.xpose.msra.mxu0 0.0
    %274 = vmatprep.subr.mxu0 0.0
    %275 = vmatpush1.xpose.msra.mxu0 0.0
    %276 = vmatprep.subr.mxu0 0.0
    %277 = vmatpush1.xpose.msra.mxu0 0.0
    %278 = vmatprep.subr.mxu0 0.0
    %279 = vmatpush1.xpose.msra.mxu0 0.0
    %280 = vmatprep.subr.mxu0 0.0
    %281 = vmatpush1.xpose.msra.mxu0 0.0
    %282 = vmatprep.subr.mxu0 0.0
    %283 = vmatpush1.xpose.msra.mxu0 0.0
    %284 = vmatprep.subr.mxu0 0.0
    %285 = vmatpush1.xpose.msra.mxu0 0.0
    %286 = vmatprep.subr.mxu0 0.0
    %287 = vmatpush1.xpose.msra.mxu0 0.0
    %288 = vmatprep.subr.mxu0 0.0
    %289 = vmatpush1.xpose.msra.mxu0 0.0
    %290 = vmatprep.subr.mxu0 0.0
    %291 = vmatpush1.xpose.msra.mxu0 0.0
    %292 = vmatprep.subr.mxu0 0.0
    %293 = vmatpush1.xpose.msra.mxu0 0.0
    %294 = vmatprep.subr.mxu0 0.0
    %295 = vmatpush1.xpose.msra.mxu0 0.0
    %296 = vmatprep.subr.mxu0 0.0
    %297 = vmatpush1.xpose.msra.mxu0 0.0
    %298 = vmatprep.subr.mxu0 0.0
    %299 = vmatpush1.xpose.msra.mxu0 0.0
    %300 = vmatprep.subr.mxu0 0.0
    %301 = vmatpush1.xpose.msra.mxu0 0.0
    %302 = vmatprep.subr.mxu0 0.0
    %303 = vmatpush1.xpose.msra.mxu0 0.0
    %304 = vmatprep.mubr.f32.mxu0 0.0
    %305 = vmatmul.mubr.f32.gmra.mrb[0].mxu0 %v236
    %v306 = vpop.f32.mrb[0].mxu0
    %v307 = vadd.f32 0.0, %v306
    %v308 = vpop.f32.mrb[0].mxu0
    %309 = vdwg.mxu0
    %v310 = vsel %vm154, 16843009, 0
    %v311 = vsel %vm155, 16843009, 0
    %v312 = vunpack.c.0.s8 %v310
    %v313 = vunpack.c.0.s8 %v311
    %vm314 = vcmp.ne.s32.totalorder %v312, 0
    %vm315 = vcmp.ne.s32.totalorder %v313, 0
    %v316 = vsel %vm314, %v230, -1e+09
    %v317 = vsel %vm315, %v307, -1e+09
    %vm318 = vcmask 64512
    %v319 = vsel %vm318, %v316, -inf
    %320 = vmax.xlane.f32.xlu0 %v319
    %v321 = vpop.xlane.xlu0 %320
    %v322 = vsel %vm318, %v317, -inf
    %323 = vmax.xlane.f32.xlu0 %v322
    %v324 = vpop.xlane.xlu0 %323
    %v325 = vsub.f32 %v316, %v321
    %v326 = vsub.f32 %v317, %v324
    %v327 = vmul.f32 %v325, 1.442695
    %v328 = vpow.pop %v327
    %v329 = vmul.f32 %v326, 1.442695
    %v330 = vpow.pop %v329
    %v331 = vsel %vm318, %v328, 0.0
    %332 = vadd.xlane.f32.xlu0 %v331
    %v333 = vpop.xlane.xlu0 %332
    %v334 = vsel %vm318, %v330, 0.0
    %335 = vadd.xlane.f32.xlu0 %v334
    %v336 = vpop.xlane.xlu0 %335
    %v337 = vrcp.pop %v333
    %v338 = vrcp.pop %v336
    %v339 = vmul.f32 %v328, %v337
    %v340 = vmul.f32 %v330, %v338
    %v342 = vsel %vm318, %v339, 0
    %344 = vmatprep.subr.mxu0 0.0
    %345 = vmatpush1.msra.mxu0 %v144
    %346 = vmatprep.subr.mxu0 0.0
    %347 = vmatpush1.msra.mxu0 0.0
    %348 = vmatprep.subr.mxu0 0.0
    %349 = vmatpush1.msra.mxu0 0.0
    %350 = vmatprep.subr.mxu0 0.0
    %351 = vmatpush1.msra.mxu0 0.0
    %352 = vmatprep.subr.mxu0 0.0
    %353 = vmatpush1.msra.mxu0 0.0
    %354 = vmatprep.subr.mxu0 0.0
    %355 = vmatpush1.msra.mxu0 0.0
    %356 = vmatprep.subr.mxu0 0.0
    %357 = vmatpush1.msra.mxu0 0.0
    %358 = vmatprep.subr.mxu0 0.0
    %359 = vmatpush1.msra.mxu0 0.0
    %360 = vmatprep.subr.mxu0 0.0
    %361 = vmatpush1.msra.mxu0 0.0
    %362 = vmatprep.subr.mxu0 0.0
    %363 = vmatpush1.msra.mxu0 0.0
    %364 = vmatprep.subr.mxu0 0.0
    %365 = vmatpush1.msra.mxu0 0.0
    %366 = vmatprep.subr.mxu0 0.0
    %367 = vmatpush1.msra.mxu0 0.0
    %368 = vmatprep.subr.mxu0 0.0
    %369 = vmatpush1.msra.mxu0 0.0
    %370 = vmatprep.subr.mxu0 0.0
    %371 = vmatpush1.msra.mxu0 0.0
    %372 = vmatprep.subr.mxu0 0.0
    %373 = vmatpush1.msra.mxu0 0.0
    %374 = vmatprep.subr.mxu0 0.0
    %375 = vmatpush1.msra.mxu0 0.0
    %376 = vmatprep.subr.mxu0 0.0
    %377 = vmatpush1.msra.mxu0 0.0
    %378 = vmatprep.subr.mxu0 0.0
    %379 = vmatpush1.msra.mxu0 0.0
    %380 = vmatprep.subr.mxu0 0.0
    %381 = vmatpush1.msra.mxu0 0.0
    %382 = vmatprep.subr.mxu0 0.0
    %383 = vmatpush1.msra.mxu0 0.0
    %384 = vmatprep.subr.mxu0 0.0
    %385 = vmatpush1.msra.mxu0 0.0
    %386 = vmatprep.subr.mxu0 0.0
    %387 = vmatpush1.msra.mxu0 0.0
    %388 = vmatprep.subr.mxu0 0.0
    %389 = vmatpush1.msra.mxu0 0.0
    %390 = vmatprep.subr.mxu0 0.0
    %391 = vmatpush1.msra.mxu0 0.0
    %392 = vmatprep.subr.mxu0 0.0
    %393 = vmatpush1.msra.mxu0 0.0
    %394 = vmatprep.subr.mxu0 0.0
    %395 = vmatpush1.msra.mxu0 0.0
    %396 = vmatprep.subr.mxu0 0.0
    %397 = vmatpush1.msra.mxu0 0.0
    %398 = vmatprep.subr.mxu0 0.0
    %399 = vmatpush1.msra.mxu0 0.0
    %400 = vmatprep.subr.mxu0 0.0
    %401 = vmatpush1.msra.mxu0 0.0
    %402 = vmatprep.subr.mxu0 0.0
    %403 = vmatpush1.msra.mxu0 0.0
    %404 = vmatprep.subr.mxu0 0.0
    %405 = vmatpush1.msra.mxu0 0.0
    %406 = vmatprep.subr.mxu0 0.0
    %407 = vmatpush1.msra.mxu0 0.0
    %408 = vmatprep.mubr.f32.mxu0 0.0
    %409 = vmatmul.mubr.f32.gmra.mrb[0].mxu0 %v342
    %v410 = vpop.f32.mrb[0].mxu0
    %v411 = vadd.f32 0.0, %v410
    %v412 = vpop.f32.mrb[0].mxu0
    %413 = vdwg.mxu0
    %v415 = vsel %vm318, %v340, 0
    %417 = vmatprep.subr.mxu0 0.0
    %418 = vmatpush1.msra.mxu0 %v150
    %419 = vmatprep.subr.mxu0 0.0
    %420 = vmatpush1.msra.mxu0 0.0
    %421 = vmatprep.subr.mxu0 0.0
    %422 = vmatpush1.msra.mxu0 0.0
    %423 = vmatprep.subr.mxu0 0.0
    %424 = vmatpush1.msra.mxu0 0.0
    %425 = vmatprep.subr.mxu0 0.0
    %426 = vmatpush1.msra.mxu0 0.0
    %427 = vmatprep.subr.mxu0 0.0
    %428 = vmatpush1.msra.mxu0 0.0
    %429 = vmatprep.subr.mxu0 0.0
    %430 = vmatpush1.msra.mxu0 0.0
    %431 = vmatprep.subr.mxu0 0.0
    %432 = vmatpush1.msra.mxu0 0.0
    %433 = vmatprep.subr.mxu0 0.0
    %434 = vmatpush1.msra.mxu0 0.0
    %435 = vmatprep.subr.mxu0 0.0
    %436 = vmatpush1.msra.mxu0 0.0
    %437 = vmatprep.subr.mxu0 0.0
    %438 = vmatpush1.msra.mxu0 0.0
    %439 = vmatprep.subr.mxu0 0.0
    %440 = vmatpush1.msra.mxu0 0.0
    %441 = vmatprep.subr.mxu0 0.0
    %442 = vmatpush1.msra.mxu0 0.0
    %443 = vmatprep.subr.mxu0 0.0
    %444 = vmatpush1.msra.mxu0 0.0
    %445 = vmatprep.subr.mxu0 0.0
    %446 = vmatpush1.msra.mxu0 0.0
    %447 = vmatprep.subr.mxu0 0.0
    %448 = vmatpush1.msra.mxu0 0.0
    %449 = vmatprep.subr.mxu0 0.0
    %450 = vmatpush1.msra.mxu0 0.0
    %451 = vmatprep.subr.mxu0 0.0
    %452 = vmatpush1.msra.mxu0 0.0
    %453 = vmatprep.subr.mxu0 0.0
    %454 = vmatpush1.msra.mxu0 0.0
    %455 = vmatprep.subr.mxu0 0.0
    %456 = vmatpush1.msra.mxu0 0.0
    %457 = vmatprep.subr.mxu0 0.0
    %458 = vmatpush1.msra.mxu0 0.0
    %459 = vmatprep.subr.mxu0 0.0
    %460 = vmatpush1.msra.mxu0 0.0
    %461 = vmatprep.subr.mxu0 0.0
    %462 = vmatpush1.msra.mxu0 0.0
    %463 = vmatprep.subr.mxu0 0.0
    %464 = vmatpush1.msra.mxu0 0.0
    %465 = vmatprep.subr.mxu0 0.0
    %466 = vmatpush1.msra.mxu0 0.0
    %467 = vmatprep.subr.mxu0 0.0
    %468 = vmatpush1.msra.mxu0 0.0
    %469 = vmatprep.subr.mxu0 0.0
    %470 = vmatpush1.msra.mxu0 0.0
    %471 = vmatprep.subr.mxu0 0.0
    %472 = vmatpush1.msra.mxu0 0.0
    %473 = vmatprep.subr.mxu0 0.0
    %474 = vmatpush1.msra.mxu0 0.0
    %475 = vmatprep.subr.mxu0 0.0
    %476 = vmatpush1.msra.mxu0 0.0
    %477 = vmatprep.subr.mxu0 0.0
    %478 = vmatpush1.msra.mxu0 0.0
    %479 = vmatprep.subr.mxu0 0.0
    %480 = vmatpush1.msra.mxu0 0.0
    %481 = vmatprep.mubr.f32.mxu0 0.0
    %482 = vmatmul.mubr.f32.gmra.mrb[0].mxu0 %v415
    %v483 = vpop.f32.mrb[0].mxu0
    %v484 = vadd.f32 0.0, %v483
    %v485 = vpop.f32.mrb[0].mxu0
    %486 = vdwg.mxu0
    %487 = vrot.lane.b32.xlu0 %v142, 96
    %v488 = vpop.permute.xlu0 %487
    %489 = vrot.lane.b32.xlu0 %v142, 32
    %v490 = vpop.permute.xlu0 %489
    %v491 = vsel %vm68, %v488, 0
    %v493 = vsel %vm68, %v490, 0
    %495 = vmatprep.subr.mxu0 0.0
    %496 = vmatpush1.xpose.msra.mxu0 %v493
    %497 = vmatprep.subr.mxu0 0.0
    %498 = vmatpush1.xpose.msra.mxu0 0.0
    %499 = vmatprep.subr.mxu0 0.0
    %500 = vmatpush1.xpose.msra.mxu0 0.0
    %501 = vmatprep.subr.mxu0 0.0
    %502 = vmatpush1.xpose.msra.mxu0 0.0
    %503 = vmatprep.subr.mxu0 0.0
    %504 = vmatpush1.xpose.msra.mxu0 0.0
    %505 = vmatprep.subr.mxu0 0.0
    %506 = vmatpush1.xpose.msra.mxu0 0.0
    %507 = vmatprep.subr.mxu0 0.0
    %508 = vmatpush1.xpose.msra.mxu0 0.0
    %509 = vmatprep.subr.mxu0 0.0
    %510 = vmatpush1.xpose.msra.mxu0 0.0
    %511 = vmatprep.subr.mxu0 0.0
    %512 = vmatpush1.xpose.msra.mxu0 0.0
    %513 = vmatprep.subr.mxu0 0.0
    %514 = vmatpush1.xpose.msra.mxu0 0.0
    %515 = vmatprep.subr.mxu0 0.0
    %516 = vmatpush1.xpose.msra.mxu0 0.0
    %517 = vmatprep.subr.mxu0 0.0
    %518 = vmatpush1.xpose.msra.mxu0 0.0
    %519 = vmatprep.subr.mxu0 0.0
    %520 = vmatpush1.xpose.msra.mxu0 0.0
    %521 = vmatprep.subr.mxu0 0.0
    %522 = vmatpush1.xpose.msra.mxu0 0.0
    %523 = vmatprep.subr.mxu0 0.0
    %524 = vmatpush1.xpose.msra.mxu0 0.0
    %525 = vmatprep.subr.mxu0 0.0
    %526 = vmatpush1.xpose.msra.mxu0 0.0
    %527 = vmatprep.subr.mxu0 0.0
    %528 = vmatpush1.xpose.msra.mxu0 0.0
    %529 = vmatprep.subr.mxu0 0.0
    %530 = vmatpush1.xpose.msra.mxu0 0.0
    %531 = vmatprep.subr.mxu0 0.0
    %532 = vmatpush1.xpose.msra.mxu0 0.0
    %533 = vmatprep.subr.mxu0 0.0
    %534 = vmatpush1.xpose.msra.mxu0 0.0
    %535 = vmatprep.subr.mxu0 0.0
    %536 = vmatpush1.xpose.msra.mxu0 0.0
    %537 = vmatprep.subr.mxu0 0.0
    %538 = vmatpush1.xpose.msra.mxu0 0.0
    %539 = vmatprep.subr.mxu0 0.0
    %540 = vmatpush1.xpose.msra.mxu0 0.0
    %541 = vmatprep.subr.mxu0 0.0
    %542 = vmatpush1.xpose.msra.mxu0 0.0
    %543 = vmatprep.subr.mxu0 0.0
    %544 = vmatpush1.xpose.msra.mxu0 0.0
    %545 = vmatprep.subr.mxu0 0.0
    %546 = vmatpush1.xpose.msra.mxu0 0.0
    %547 = vmatprep.subr.mxu0 0.0
    %548 = vmatpush1.xpose.msra.mxu0 0.0
    %549 = vmatprep.subr.mxu0 0.0
    %550 = vmatpush1.xpose.msra.mxu0 0.0
    %551 = vmatprep.subr.mxu0 0.0
    %552 = vmatpush1.xpose.msra.mxu0 0.0
    %553 = vmatprep.subr.mxu0 0.0
    %554 = vmatpush1.xpose.msra.mxu0 0.0
    %555 = vmatprep.subr.mxu0 0.0
    %556 = vmatpush1.xpose.msra.mxu0 0.0
    %557 = vmatprep.subr.mxu0 0.0
    %558 = vmatpush1.xpose.msra.mxu0 0.0
    %559 = vmatprep.mubr.f32.mxu0 0.0
    %560 = vmatmul.mubr.f32.gmra.mrb[0].mxu0 %v491
    %v561 = vpop.f32.mrb[0].mxu0
    %v562 = vadd.f32 0.0, %v561
    %v563 = vpop.f32.mrb[0].mxu0
    %564 = vdwg.mxu0
    %565 = vrot.lane.b32.xlu0 %v148, 96
    %v566 = vpop.permute.xlu0 %565
    %567 = vrot.lane.b32.xlu0 %v148, 32
    %v568 = vpop.permute.xlu0 %567
    %v569 = vsel %vm68, %v566, 0
    %v571 = vsel %vm68, %v568, 0
    %573 = vmatprep.subr.mxu0 0.0
    %574 = vmatpush1.xpose.msra.mxu0 %v571
    %575 = vmatprep.subr.mxu0 0.0
    %576 = vmatpush1.xpose.msra.mxu0 0.0
    %577 = vmatprep.subr.mxu0 0.0
    %578 = vmatpush1.xpose.msra.mxu0 0.0
    %579 = vmatprep.subr.mxu0 0.0
    %580 = vmatpush1.xpose.msra.mxu0 0.0
    %581 = vmatprep.subr.mxu0 0.0
    %582 = vmatpush1.xpose.msra.mxu0 0.0
    %583 = vmatprep.subr.mxu0 0.0
    %584 = vmatpush1.xpose.msra.mxu0 0.0
    %585 = vmatprep.subr.mxu0 0.0
    %586 = vmatpush1.xpose.msra.mxu0 0.0
    %587 = vmatprep.subr.mxu0 0.0
    %588 = vmatpush1.xpose.msra.mxu0 0.0
    %589 = vmatprep.subr.mxu0 0.0
    %590 = vmatpush1.xpose.msra.mxu0 0.0
    %591 = vmatprep.subr.mxu0 0.0
    %592 = vmatpush1.xpose.msra.mxu0 0.0
    %593 = vmatprep.subr.mxu0 0.0
    %594 = vmatpush1.xpose.msra.mxu0 0.0
    %595 = vmatprep.subr.mxu0 0.0
    %596 = vmatpush1.xpose.msra.mxu0 0.0
    %597 = vmatprep.subr.mxu0 0.0
    %598 = vmatpush1.xpose.msra.mxu0 0.0
    %599 = vmatprep.subr.mxu0 0.0
    %600 = vmatpush1.xpose.msra.mxu0 0.0
    %601 = vmatprep.subr.mxu0 0.0
    %602 = vmatpush1.xpose.msra.mxu0 0.0
    %603 = vmatprep.subr.mxu0 0.0
    %604 = vmatpush1.xpose.msra.mxu0 0.0
    %605 = vmatprep.subr.mxu0 0.0
    %606 = vmatpush1.xpose.msra.mxu0 0.0
    %607 = vmatprep.subr.mxu0 0.0
    %608 = vmatpush1.xpose.msra.mxu0 0.0
    %609 = vmatprep.subr.mxu0 0.0
    %610 = vmatpush1.xpose.msra.mxu0 0.0
    %611 = vmatprep.subr.mxu0 0.0
    %612 = vmatpush1.xpose.msra.mxu0 0.0
    %613 = vmatprep.subr.mxu0 0.0
    %614 = vmatpush1.xpose.msra.mxu0 0.0
    %615 = vmatprep.subr.mxu0 0.0
    %616 = vmatpush1.xpose.msra.mxu0 0.0
    %617 = vmatprep.subr.mxu0 0.0
    %618 = vmatpush1.xpose.msra.mxu0 0.0
    %619 = vmatprep.subr.mxu0 0.0
    %620 = vmatpush1.xpose.msra.mxu0 0.0
    %621 = vmatprep.subr.mxu0 0.0
    %622 = vmatpush1.xpose.msra.mxu0 0.0
    %623 = vmatprep.subr.mxu0 0.0
    %624 = vmatpush1.xpose.msra.mxu0 0.0
    %625 = vmatprep.subr.mxu0 0.0
    %626 = vmatpush1.xpose.msra.mxu0 0.0
    %627 = vmatprep.subr.mxu0 0.0
    %628 = vmatpush1.xpose.msra.mxu0 0.0
    %629 = vmatprep.subr.mxu0 0.0
    %630 = vmatpush1.xpose.msra.mxu0 0.0
    %631 = vmatprep.subr.mxu0 0.0
    %632 = vmatpush1.xpose.msra.mxu0 0.0
    %633 = vmatprep.subr.mxu0 0.0
    %634 = vmatpush1.xpose.msra.mxu0 0.0
    %635 = vmatprep.subr.mxu0 0.0
    %636 = vmatpush1.xpose.msra.mxu0 0.0
    %637 = vmatprep.mubr.f32.mxu0 0.0
    %638 = vmatmul.mubr.f32.gmra.mrb[0].mxu0 %v569
    %v639 = vpop.f32.mrb[0].mxu0
    %v640 = vadd.f32 0.0, %v639
    %v641 = vpop.f32.mrb[0].mxu0
    %642 = vdwg.mxu0
    %v643 = vsel %vm314, %v562, -1e+09
    %v644 = vsel %vm315, %v640, -1e+09
    %v645 = vsel %vm318, %v643, -inf
    %646 = vmax.xlane.f32.xlu0 %v645
    %v647 = vpop.xlane.xlu0 %646
    %v648 = vsel %vm318, %v644, -inf
    %649 = vmax.xlane.f32.xlu0 %v648
    %v650 = vpop.xlane.xlu0 %649
    %v651 = vsub.f32 %v643, %v647
    %v652 = vsub.f32 %v644, %v650
    %v653 = vmul.f32 %v651, 1.442695
    %v654 = vpow.pop %v653
    %v655 = vmul.f32 %v652, 1.442695
    %v656 = vpow.pop %v655
    %v657 = vsel %vm318, %v654, 0.0
    %658 = vadd.xlane.f32.xlu0 %v657
    %v659 = vpop.xlane.xlu0 %658
    %v660 = vsel %vm318, %v656, 0.0
    %661 = vadd.xlane.f32.xlu0 %v660
    %v662 = vpop.xlane.xlu0 %661
    %v663 = vrcp.pop %v659
    %v664 = vrcp.pop %v662
    %v665 = vmul.f32 %v654, %v663
    %v666 = vmul.f32 %v656, %v664
    %668 = vrot.lane.b32.xlu0 %v144, 96
    %v669 = vpop.permute.xlu0 %668
    %v672 = vsel %vm318, %v665, 0
    %674 = vmatprep.subr.mxu0 0.0
    %675 = vmatpush1.msra.mxu0 %v669
    %676 = vmatprep.subr.mxu0 0.0
    %677 = vmatpush1.msra.mxu0 0.0
    %678 = vmatprep.subr.mxu0 0.0
    %679 = vmatpush1.msra.mxu0 0.0
    %680 = vmatprep.subr.mxu0 0.0
    %681 = vmatpush1.msra.mxu0 0.0
    %682 = vmatprep.subr.mxu0 0.0
    %683 = vmatpush1.msra.mxu0 0.0
    %684 = vmatprep.subr.mxu0 0.0
    %685 = vmatpush1.msra.mxu0 0.0
    %686 = vmatprep.subr.mxu0 0.0
    %687 = vmatpush1.msra.mxu0 0.0
    %688 = vmatprep.subr.mxu0 0.0
    %689 = vmatpush1.msra.mxu0 0.0
    %690 = vmatprep.subr.mxu0 0.0
    %691 = vmatpush1.msra.mxu0 0.0
    %692 = vmatprep.subr.mxu0 0.0
    %693 = vmatpush1.msra.mxu0 0.0
    %694 = vmatprep.subr.mxu0 0.0
    %695 = vmatpush1.msra.mxu0 0.0
    %696 = vmatprep.subr.mxu0 0.0
    %697 = vmatpush1.msra.mxu0 0.0
    %698 = vmatprep.subr.mxu0 0.0
    %699 = vmatpush1.msra.mxu0 0.0
    %700 = vmatprep.subr.mxu0 0.0
    %701 = vmatpush1.msra.mxu0 0.0
    %702 = vmatprep.subr.mxu0 0.0
    %703 = vmatpush1.msra.mxu0 0.0
    %704 = vmatprep.subr.mxu0 0.0
    %705 = vmatpush1.msra.mxu0 0.0
    %706 = vmatprep.subr.mxu0 0.0
    %707 = vmatpush1.msra.mxu0 0.0
    %708 = vmatprep.subr.mxu0 0.0
    %709 = vmatpush1.msra.mxu0 0.0
    %710 = vmatprep.subr.mxu0 0.0
    %711 = vmatpush1.msra.mxu0 0.0
    %712 = vmatprep.subr.mxu0 0.0
    %713 = vmatpush1.msra.mxu0 0.0
    %714 = vmatprep.subr.mxu0 0.0
    %715 = vmatpush1.msra.mxu0 0.0
    %716 = vmatprep.subr.mxu0 0.0
    %717 = vmatpush1.msra.mxu0 0.0
    %718 = vmatprep.subr.mxu0 0.0
    %719 = vmatpush1.msra.mxu0 0.0
    %720 = vmatprep.subr.mxu0 0.0
    %721 = vmatpush1.msra.mxu0 0.0
    %722 = vmatprep.subr.mxu0 0.0
    %723 = vmatpush1.msra.mxu0 0.0
    %724 = vmatprep.subr.mxu0 0.0
    %725 = vmatpush1.msra.mxu0 0.0
    %726 = vmatprep.subr.mxu0 0.0
    %727 = vmatpush1.msra.mxu0 0.0
    %728 = vmatprep.subr.mxu0 0.0
    %729 = vmatpush1.msra.mxu0 0.0
    %730 = vmatprep.subr.mxu0 0.0
    %731 = vmatpush1.msra.mxu0 0.0
    %732 = vmatprep.subr.mxu0 0.0
    %733 = vmatpush1.msra.mxu0 0.0
    %734 = vmatprep.subr.mxu0 0.0
    %735 = vmatpush1.msra.mxu0 0.0
    %736 = vmatprep.subr.mxu0 0.0
    %737 = vmatpush1.msra.mxu0 0.0
    %738 = vmatprep.mubr.f32.mxu0 0.0
    %739 = vmatmul.mubr.f32.gmra.mrb[0].mxu0 %v672
    %v740 = vpop.f32.mrb[0].mxu0
    %v741 = vadd.f32 0.0, %v740
    %v742 = vpop.f32.mrb[0].mxu0
    %743 = vdwg.mxu0
    %745 = vrot.lane.b32.xlu0 %v150, 96
    %v746 = vpop.permute.xlu0 %745
    %v749 = vsel %vm318, %v666, 0
    %751 = vmatprep.subr.mxu0 0.0
    %752 = vmatpush1.msra.mxu0 %v746
    %753 = vmatprep.subr.mxu0 0.0
    %754 = vmatpush1.msra.mxu0 0.0
    %755 = vmatprep.subr.mxu0 0.0
    %756 = vmatpush1.msra.mxu0 0.0
    %757 = vmatprep.subr.mxu0 0.0
    %758 = vmatpush1.msra.mxu0 0.0
    %759 = vmatprep.subr.mxu0 0.0
    %760 = vmatpush1.msra.mxu0 0.0
    %761 = vmatprep.subr.mxu0 0.0
    %762 = vmatpush1.msra.mxu0 0.0
    %763 = vmatprep.subr.mxu0 0.0
    %764 = vmatpush1.msra.mxu0 0.0
    %765 = vmatprep.subr.mxu0 0.0
    %766 = vmatpush1.msra.mxu0 0.0
    %767 = vmatprep.subr.mxu0 0.0
    %768 = vmatpush1.msra.mxu0 0.0
    %769 = vmatprep.subr.mxu0 0.0
    %770 = vmatpush1.msra.mxu0 0.0
    %771 = vmatprep.subr.mxu0 0.0
    %772 = vmatpush1.msra.mxu0 0.0
    %773 = vmatprep.subr.mxu0 0.0
    %774 = vmatpush1.msra.mxu0 0.0
    %775 = vmatprep.subr.mxu0 0.0
    %776 = vmatpush1.msra.mxu0 0.0
    %777 = vmatprep.subr.mxu0 0.0
    %778 = vmatpush1.msra.mxu0 0.0
    %779 = vmatprep.subr.mxu0 0.0
    %780 = vmatpush1.msra.mxu0 0.0
    %781 = vmatprep.subr.mxu0 0.0
    %782 = vmatpush1.msra.mxu0 0.0
    %783 = vmatprep.subr.mxu0 0.0
    %784 = vmatpush1.msra.mxu0 0.0
    %785 = vmatprep.subr.mxu0 0.0
    %786 = vmatpush1.msra.mxu0 0.0
    %787 = vmatprep.subr.mxu0 0.0
    %788 = vmatpush1.msra.mxu0 0.0
    %789 = vmatprep.subr.mxu0 0.0
    %790 = vmatpush1.msra.mxu0 0.0
    %791 = vmatprep.subr.mxu0 0.0
    %792 = vmatpush1.msra.mxu0 0.0
    %793 = vmatprep.subr.mxu0 0.0
    %794 = vmatpush1.msra.mxu0 0.0
    %795 = vmatprep.subr.mxu0 0.0
    %796 = vmatpush1.msra.mxu0 0.0
    %797 = vmatprep.subr.mxu0 0.0
    %798 = vmatpush1.msra.mxu0 0.0
    %799 = vmatprep.subr.mxu0 0.0
    %800 = vmatpush1.msra.mxu0 0.0
    %801 = vmatprep.subr.mxu0 0.0
    %802 = vmatpush1.msra.mxu0 0.0
    %803 = vmatprep.subr.mxu0 0.0
    %804 = vmatpush1.msra.mxu0 0.0
    %805 = vmatprep.subr.mxu0 0.0
    %806 = vmatpush1.msra.mxu0 0.0
    %807 = vmatprep.subr.mxu0 0.0
    %808 = vmatpush1.msra.mxu0 0.0
    %809 = vmatprep.subr.mxu0 0.0
    %810 = vmatpush1.msra.mxu0 0.0
    %811 = vmatprep.subr.mxu0 0.0
    %812 = vmatpush1.msra.mxu0 0.0
    %813 = vmatprep.subr.mxu0 0.0
    %814 = vmatpush1.msra.mxu0 0.0
    %815 = vmatprep.mubr.f32.mxu0 0.0
    %816 = vmatmul.mubr.f32.gmra.mrb[0].mxu0 %v749
    %v817 = vpop.f32.mrb[0].mxu0
    %v818 = vadd.f32 0.0, %v817
    %v819 = vpop.f32.mrb[0].mxu0
    %820 = vdwg.mxu0
    %823 = vrot.lane.b32.xlu0 %v741, 32
    %v824 = vpop.permute.xlu0 %823
    %825 = vrot.lane.b32.xlu0 %v818, 32
    %v826 = vpop.permute.xlu0 %825
    %v829 = vsel %vm68, %v411, %v824
    %v830 = vsel %vm68, %v484, %v826
    %v831 = vld [vmem:[%s4] sm:$0xff]
    %v832 = vld [vmem:[%s4 + $0x8] sm:$0xff]
    %v833 = vld [vmem:[%s4 + $0x10] sm:$0xff]
    %v834 = vld [vmem:[%s4 + $0x18] sm:$0xff]
    %v835 = vld [vmem:[%s4 + $0x20] sm:$0xff]
    %v836 = vld [vmem:[%s4 + $0x28] sm:$0xff]
    %v837 = vld [vmem:[%s4 + $0x30] sm:$0xff]
    %v838 = vld [vmem:[%s4 + $0x38] sm:$0xff]
    %v839 = vld [vmem:[%s5] sm:$0x1]
    %v841 = vlaneseq
    %v842 = vshrl.u32 %v841, 7
    %v843 = vsub.s32 0, %v842
    %v844 = vrot.slane %v839, %v843
    %vm846 = vcmask 523264
    %v848 = vsel %vm846, %v829, 0
    %v851 = vsel %vm846, %v830, 0
    %853 = vmatprep.subr.mxu0 0.0
    %854 = vmatpush1.msra.mxu0 %v831
    %855 = vmatprep.subr.mxu0 0.0
    %856 = vmatpush1.msra.mxu0 %v832
    %857 = vmatprep.subr.mxu0 0.0
    %858 = vmatpush1.msra.mxu0 %v833
    %859 = vmatprep.subr.mxu0 0.0
    %860 = vmatpush1.msra.mxu0 %v834
    %861 = vmatprep.subr.mxu0 0.0
    %862 = vmatpush1.msra.mxu0 %v835
    %863 = vmatprep.subr.mxu0 0.0
    %864 = vmatpush1.msra.mxu0 %v836
    %865 = vmatprep.subr.mxu0 0.0
    %866 = vmatpush1.msra.mxu0 %v837
    %867 = vmatprep.subr.mxu0 0.0
    %868 = vmatpush1.msra.mxu0 %v838
    %869 = vmatprep.subr.mxu0 0.0
    %870 = vmatpush1.msra.mxu0 0.0
    %871 = vmatprep.subr.mxu0 0.0
    %872 = vmatpush1.msra.mxu0 0.0
    %873 = vmatprep.subr.mxu0 0.0
    %874 = vmatpush1.msra.mxu0 0.0
    %875 = vmatprep.subr.mxu0 0.0
    %876 = vmatpush1.msra.mxu0 0.0
    %877 = vmatprep.subr.mxu0 0.0
    %878 = vmatpush1.msra.mxu0 0.0
    %879 = vmatprep.subr.mxu0 0.0
    %880 = vmatpush1.msra.mxu0 0.0
    %881 = vmatprep.subr.mxu0 0.0
    %882 = vmatpush1.msra.mxu0 0.0
    %883 = vmatprep.subr.mxu0 0.0
    %884 = vmatpush1.msra.mxu0 0.0
    %885 = vmatprep.subr.mxu0 0.0
    %886 = vmatpush1.msra.mxu0 0.0
    %887 = vmatprep.subr.mxu0 0.0
    %888 = vmatpush1.msra.mxu0 0.0
    %889 = vmatprep.subr.mxu0 0.0
    %890 = vmatpush1.msra.mxu0 0.0
    %891 = vmatprep.subr.mxu0 0.0
    %892 = vmatpush1.msra.mxu0 0.0
    %893 = vmatprep.subr.mxu0 0.0
    %894 = vmatpush1.msra.mxu0 0.0
    %895 = vmatprep.subr.mxu0 0.0
    %896 = vmatpush1.msra.mxu0 0.0
    %897 = vmatprep.subr.mxu0 0.0
    %898 = vmatpush1.msra.mxu0 0.0
    %899 = vmatprep.subr.mxu0 0.0
    %900 = vmatpush1.msra.mxu0 0.0
    %901 = vmatprep.subr.mxu0 0.0
    %902 = vmatpush1.msra.mxu0 0.0
    %903 = vmatprep.subr.mxu0 0.0
    %904 = vmatpush1.msra.mxu0 0.0
    %905 = vmatprep.subr.mxu0 0.0
    %906 = vmatpush1.msra.mxu0 0.0
    %907 = vmatprep.subr.mxu0 0.0
    %908 = vmatpush1.msra.mxu0 0.0
    %909 = vmatprep.subr.mxu0 0.0
    %910 = vmatpush1.msra.mxu0 0.0
    %911 = vmatprep.subr.mxu0 0.0
    %912 = vmatpush1.msra.mxu0 0.0
    %913 = vmatprep.subr.mxu0 0.0
    %914 = vmatpush1.msra.mxu0 0.0
    %915 = vmatprep.subr.mxu0 0.0
    %916 = vmatpush1.msra.mxu0 0.0
    %917 = vmatprep.mubr.f32.mxu0 0.0
    %918 = vmatmul.mubr.f32.gmra.mrb[0].mxu0 %v848
    %v919 = vpop.f32.mrb[0].mxu0
    %v920 = vadd.f32 %v844, %v919
    %v921 = vpop.f32.mrb[0].mxu0
    %922 = vmatprep.mubr.f32.mxu0 0.0
    %923 = vmatmul.mubr.f32.gmra.mrb[0].mxu0 %v851
    %v924 = vpop.f32.mrb[0].mxu0
    %v925 = vadd.f32 %v844, %v924
    %v926 = vpop.f32.mrb[0].mxu0
    %927 = vdwg.mxu0
    %v928 = vld [vmem:[%s6] sm:$0xff]
    %v929 = vld [vmem:[%s6 + $0x8] sm:$0xff]
    %v930 = vld [vmem:[%s6 + $0x10] sm:$0xff]
    %v931 = vld [vmem:[%s6 + $0x18] sm:$0xff]
    %v932 = vld [vmem:[%s7] sm:$0x1]
    %v934 = vlaneseq
    %v935 = vshrl.u32 %v934, 7
    %v936 = vsub.s32 0, %v935
    %v937 = vrot.slane %v932, %v936
    %v940 = vsel %vm68, %v920, 0
    %v943 = vsel %vm68, %v925, 0
    %945 = vmatprep.subr.mxu0 0.0
    %946 = vmatpush1.msra.mxu0 %v928
    %947 = vmatprep.subr.mxu0 0.0
    %948 = vmatpush1.msra.mxu0 %v929
    %949 = vmatprep.subr.mxu0 0.0
    %950 = vmatpush1.msra.mxu0 %v930
    %951 = vmatprep.subr.mxu0 0.0
    %952 = vmatpush1.msra.mxu0 %v931
    %953 = vmatprep.subr.mxu0 0.0
    %954 = vmatpush1.msra.mxu0 0.0
    %955 = vmatprep.subr.mxu0 0.0
    %956 = vmatpush1.msra.mxu0 0.0
    %957 = vmatprep.subr.mxu0 0.0
    %958 = vmatpush1.msra.mxu0 0.0
    %959 = vmatprep.subr.mxu0 0.0
    %960 = vmatpush1.msra.mxu0 0.0
    %961 = vmatprep.subr.mxu0 0.0
    %962 = vmatpush1.msra.mxu0 0.0
    %963 = vmatprep.subr.mxu0 0.0
    %964 = vmatpush1.msra.mxu0 0.0
    %965 = vmatprep.subr.mxu0 0.0
    %966 = vmatpush1.msra.mxu0 0.0
    %967 = vmatprep.subr.mxu0 0.0
    %968 = vmatpush1.msra.mxu0 0.0
    %969 = vmatprep.subr.mxu0 0.0
    %970 = vmatpush1.msra.mxu0 0.0
    %971 = vmatprep.subr.mxu0 0.0
    %972 = vmatpush1.msra.mxu0 0.0
    %973 = vmatprep.subr.mxu0 0.0
    %974 = vmatpush1.msra.mxu0 0.0
    %975 = vmatprep.subr.mxu0 0.0
    %976 = vmatpush1.msra.mxu0 0.0
    %977 = vmatprep.subr.mxu0 0.0
    %978 = vmatpush1.msra.mxu0 0.0
    %979 = vmatprep.subr.mxu0 0.0
    %980 = vmatpush1.msra.mxu0 0.0
    %981 = vmatprep.subr.mxu0 0.0
    %982 = vmatpush1.msra.mxu0 0.0
    %983 = vmatprep.subr.mxu0 0.0
    %984 = vmatpush1.msra.mxu0 0.0
    %985 = vmatprep.subr.mxu0 0.0
    %986 = vmatpush1.msra.mxu0 0.0
    %987 = vmatprep.subr.mxu0 0.0
    %988 = vmatpush1.msra.mxu0 0.0
    %989 = vmatprep.subr.mxu0 0.0
    %990 = vmatpush1.msra.mxu0 0.0
    %991 = vmatprep.subr.mxu0 0.0
    %992 = vmatpush1.msra.mxu0 0.0
    %993 = vmatprep.subr.mxu0 0.0
    %994 = vmatpush1.msra.mxu0 0.0
    %995 = vmatprep.subr.mxu0 0.0
    %996 = vmatpush1.msra.mxu0 0.0
    %997 = vmatprep.subr.mxu0 0.0
    %998 = vmatpush1.msra.mxu0 0.0
    %999 = vmatprep.subr.mxu0 0.0
    %1000 = vmatpush1.msra.mxu0 0.0
    %1001 = vmatprep.subr.mxu0 0.0
    %1002 = vmatpush1.msra.mxu0 0.0
    %1003 = vmatprep.subr.mxu0 0.0
    %1004 = vmatpush1.msra.mxu0 0.0
    %1005 = vmatprep.subr.mxu0 0.0
    %1006 = vmatpush1.msra.mxu0 0.0
    %1007 = vmatprep.subr.mxu0 0.0
    %1008 = vmatpush1.msra.mxu0 0.0
    %1009 = vmatprep.mubr.f32.mxu0 0.0
    %1010 = vmatmul.mubr.f32.gmra.mrb[0].mxu0 %v940
    %v1011 = vpop.f32.mrb[0].mxu0
    %v1012 = vadd.f32 %v937, %v1011
    %v1013 = vpop.f32.mrb[0].mxu0
    %1014 = vmatprep.mubr.f32.mxu0 0.0
    %1015 = vmatmul.mubr.f32.gmra.mrb[0].mxu0 %v943
    %v1016 = vpop.f32.mrb[0].mxu0
    %v1017 = vadd.f32 %v937, %v1016
    %v1018 = vpop.f32.mrb[0].mxu0
    %1019 = vdwg.mxu0
    %v1020 = vmax.f32 %v1012, 0.0
    %v1021 = vmax.f32 %v1017, 0.0
    %v1022 = vld [vmem:[%s8] sm:$0xff]
    %v1023 = vld [vmem:[%s8 + $0x8] sm:$0xff]
    %v1024 = vld [vmem:[%s8 + $0x10] sm:$0xff]
    %v1025 = vld [vmem:[%s8 + $0x18] sm:$0xff]
    %v1026 = vld [vmem:[%s8 + $0x20] sm:$0xff]
    %v1027 = vld [vmem:[%s8 + $0x28] sm:$0xff]
    %v1028 = vld [vmem:[%s8 + $0x30] sm:$0xff]
    %v1029 = vld [vmem:[%s8 + $0x38] sm:$0xff]
    %v1030 = vld [vmem:[%s9] sm:$0x1]
    %v1032 = vlaneseq
    %v1033 = vshrl.u32 %v1032, 7
    %v1034 = vsub.s32 0, %v1033
    %v1035 = vrot.slane %v1030, %v1034
    %v1038 = vsel %vm846, %v1020, 0
    %v1041 = vsel %vm846, %v1021, 0
    %1043 = vmatprep.subr.mxu0 0.0
    %1044 = vmatpush1.msra.mxu0 %v1022
    %1045 = vmatprep.subr.mxu0 0.0
    %1046 = vmatpush1.msra.mxu0 %v1023
    %1047 = vmatprep.subr.mxu0 0.0
    %1048 = vmatpush1.msra.mxu0 %v1024
    %1049 = vmatprep.subr.mxu0 0.0
    %1050 = vmatpush1.msra.mxu0 %v1025
    %1051 = vmatprep.subr.mxu0 0.0
    %1052 = vmatpush1.msra.mxu0 %v1026
    %1053 = vmatprep.subr.mxu0 0.0
    %1054 = vmatpush1.msra.mxu0 %v1027
    %1055 = vmatprep.subr.mxu0 0.0
    %1056 = vmatpush1.msra.mxu0 %v1028
    %1057 = vmatprep.subr.mxu0 0.0
    %1058 = vmatpush1.msra.mxu0 %v1029
    %1059 = vmatprep.subr.mxu0 0.0
    %1060 = vmatpush1.msra.mxu0 0.0
    %1061 = vmatprep.subr.mxu0 0.0
    %1062 = vmatpush1.msra.mxu0 0.0
    %1063 = vmatprep.subr.mxu0 0.0
    %1064 = vmatpush1.msra.mxu0 0.0
    %1065 = vmatprep.subr.mxu0 0.0
    %1066 = vmatpush1.msra.mxu0 0.0
    %1067 = vmatprep.subr.mxu0 0.0
    %1068 = vmatpush1.msra.mxu0 0.0
    %1069 = vmatprep.subr.mxu0 0.0
    %1070 = vmatpush1.msra.mxu0 0.0
    %1071 = vmatprep.subr.mxu0 0.0
    %1072 = vmatpush1.msra.mxu0 0.0
    %1073 = vmatprep.subr.mxu0 0.0
    %1074 = vmatpush1.msra.mxu0 0.0
    %1075 = vmatprep.subr.mxu0 0.0
    %1076 = vmatpush1.msra.mxu0 0.0
    %1077 = vmatprep.subr.mxu0 0.0
    %1078 = vmatpush1.msra.mxu0 0.0
    %1079 = vmatprep.subr.mxu0 0.0
    %1080 = vmatpush1.msra.mxu0 0.0
    %1081 = vmatprep.subr.mxu0 0.0
    %1082 = vmatpush1.msra.mxu0 0.0
    %1083 = vmatprep.subr.mxu0 0.0
    %1084 = vmatpush1.msra.mxu0 0.0
    %1085 = vmatprep.subr.mxu0 0.0
    %1086 = vmatpush1.msra.mxu0 0.0
    %1087 = vmatprep.subr.mxu0 0.0
    %1088 = vmatpush1.msra.mxu0 0.0
    %1089 = vmatprep.subr.mxu0 0.0
    %1090 = vmatpush1.msra.mxu0 0.0
    %1091 = vmatprep.subr.mxu0 0.0
    %1092 = vmatpush1.msra.mxu0 0.0
    %1093 = vmatprep.subr.mxu0 0.0
    %1094 = vmatpush1.msra.mxu0 0.0
    %1095 = vmatprep.subr.mxu0 0.0
    %1096 = vmatpush1.msra.mxu0 0.0
    %1097 = vmatprep.subr.mxu0 0.0
    %1098 = vmatpush1.msra.mxu0 0.0
    %1099 = vmatprep.subr.mxu0 0.0
    %1100 = vmatpush1.msra.mxu0 0.0
    %1101 = vmatprep.subr.mxu0 0.0
    %1102 = vmatpush1.msra.mxu0 0.0
    %1103 = vmatprep.subr.mxu0 0.0
    %1104 = vmatpush1.msra.mxu0 0.0
    %1105 = vmatprep.subr.mxu0 0.0
    %1106 = vmatpush1.msra.mxu0 0.0
    %1107 = vmatprep.mubr.f32.mxu0 0.0
    %1108 = vmatmul.mubr.f32.gmra.mrb[0].mxu0 %v1038
    %v1109 = vpop.f32.mrb[0].mxu0
    %v1110 = vadd.f32 %v1035, %v1109
    %v1111 = vpop.f32.mrb[0].mxu0
    %1112 = vmatprep.mubr.f32.mxu0 0.0
    %1113 = vmatmul.mubr.f32.gmra.mrb[0].mxu0 %v1041
    %v1114 = vpop.f32.mrb[0].mxu0
    %v1115 = vadd.f32 %v1035, %v1114
    %v1116 = vpop.f32.mrb[0].mxu0
    %1117 = vdwg.mxu0
    %1118 = vst.msk [vmem:[#allocation2] sm:$0xff] %vm68, %v1110
    %1119 = vst.msk [vmem:[#allocation2 + $0x8] sm:$0xff] %vm68, %v1115
    // Predicated region
    $region46: #{tpu_custom_call.1} parent=1 // pred_check
      _
    $region47: #{tpu_custom_call.1} parent=1 // pred_check_branch
      %1121 = sbr.rel (0) target = $region49
    $region48: #{tpu_custom_call.1} parent=1 // pred_region
      %s1123 = ssub.s32 256, 256
      %1124 = vsyncadd [#allocation3], %s1123
      %s1125 = sshll.u32 [#allocation2], 4
      %s1126 = int_to_ptr.vmem [resolvable:$true] %s1125
      %1131 = dma.vmem_to_hbm [thread:$0]  %s1126, 256, %s11, [#allocation3], 128, 128, 8
    $region49: #{tpu_custom_call.1} parent=1 // pred_fallthru
      _
    // Predicated region
    $region50: #{tpu_custom_call.1} parent=1 // pred_check
      _
    $region51: #{tpu_custom_call.1} parent=1 // pred_check_branch
      %1133 = sbr.rel (0) target = $region53
    $region52: #{tpu_custom_call.1} parent=1 // pred_region
      %1134 = dma.done [#allocation3], 256
    $region53: #{tpu_custom_call.1} parent=1 // pred_fallthru
      _
    %1135 = vsyncpa [#allocation3], 1

// kernel: tpu_custom_call.1
$region0: #{tpu_custom_call.1}
  #allocation0 [shape = 'u32[]', space=smem, size = 0x4, offset = 0x4, fixed_abs, tag = 'smem constant byte address 0x4 - core index']
  #allocation1 [shape = 'u32[144,128]{1,0:T(1,128)}', space=vmem, size = 0x12000, scoped, tag = 'internal scratch']
  %s0 = inlined_call_operand.vmem [shape: f32[2,8,32], index: 0, kind: input, shape index: {}]
  %s1 = inlined_call_operand.vmem [shape: f32[8,32], index: 1, kind: input, shape index: {}]
  %s2 = inlined_call_operand.vmem [shape: f32[32,192], index: 2, kind: input, shape index: {}]
  %s3 = inlined_call_operand.vmem [shape: f32[1,192], index: 3, kind: input, shape index: {}]
  %s4 = inlined_call_operand.vmem [shape: f32[64,32], index: 4, kind: input, shape index: {}]
  %s5 = inlined_call_operand.vmem [shape: f32[1,32], index: 5, kind: input, shape index: {}]
  %s6 = inlined_call_operand.vmem [shape: f32[32,64], index: 6, kind: input, shape index: {}]
  %s7 = inlined_call_operand.vmem [shape: f32[1,64], index: 7, kind: input, shape index: {}]
  %s8 = inlined_call_operand.vmem [shape: f32[64,32], index: 8, kind: input, shape index: {}]
  %s9 = inlined_call_operand.vmem [shape: f32[1,32], index: 9, kind: input, shape index: {}]
  %s10 = inlined_call_operand.vmem [shape: s8[2,8,8], index: 10, kind: input, shape index: {}]
  %s11 = inlined_call_operand.hbm [shape: f32[16,32], index: 11, kind: output, shape index: {}]
  %s12 = sld [smem:[#allocation0]]
  $region54: #{tpu_custom_call.1} parent=0
    _
  %s14 = ssub.s32 1, %s12
  %s15 = scalar_select 0, %s14, %s12
  $region1: #{tpu_custom_call.1} parent=0
    #allocation2 [shape = 'u8[8192]{0}', space=vmem, size = 0x2000, scoped, tag = 'output window, operand 0, single buffered']
    #allocation3 [shape = 's32[1]{0}', space=sflag, size = 0x4, scoped, tag = 'scoped memory for tpu_custom_call.1']
    %16 = vsyncpa [#allocation3], 0
    // Predicated region
    $region2: #{tpu_custom_call.1} parent=1 // pred_check
      _
    $region3: #{tpu_custom_call.1} parent=1 // pred_check_branch
      %18 = sbr.rel (0) target = $region5
    $region4: #{tpu_custom_call.1} parent=1 // pred_region
      _
    $region5: #{tpu_custom_call.1} parent=1 // pred_fallthru
      _
    // Predicated region
    $region6: #{tpu_custom_call.1} parent=1 // pred_check
      _
    $region7: #{tpu_custom_call.1} parent=1 // pred_check_branch
      %20 = sbr.rel (0) target = $region9
    $region8: #{tpu_custom_call.1} parent=1 // pred_region
      _
    $region9: #{tpu_custom_call.1} parent=1 // pred_fallthru
      _
    // Predicated region
    $region10: #{tpu_custom_call.1} parent=1 // pred_check
      _
    $region11: #{tpu_custom_call.1} parent=1 // pred_check_branch
      %22 = sbr.rel (0) target = $region13
    $region12: #{tpu_custom_call.1} parent=1 // pred_region
      _
    $region13: #{tpu_custom_call.1} parent=1 // pred_fallthru
      _
    // Predicated region
    $region14: #{tpu_custom_call.1} parent=1 // pred_check
      _
    $region15: #{tpu_custom_call.1} parent=1 // pred_check_branch
      %24 = sbr.rel (0) target = $region17
    $region16: #{tpu_custom_call.1} parent=1 // pred_region
      _
    $region17: #{tpu_custom_call.1} parent=1 // pred_fallthru
      _
    // Predicated region
    $region18: #{tpu_custom_call.1} parent=1 // pred_check
      _
    $region19: #{tpu_custom_call.1} parent=1 // pred_check_branch
      %26 = sbr.rel (0) target = $region21
    $region20: #{tpu_custom_call.1} parent=1 // pred_region
      _
    $region21: #{tpu_custom_call.1} parent=1 // pred_fallthru
      _
    // Predicated region
    $region22: #{tpu_custom_call.1} parent=1 // pred_check
      _
    $region23: #{tpu_custom_call.1} parent=1 // pred_check_branch
      %28 = sbr.rel (0) target = $region25
    $region24: #{tpu_custom_call.1} parent=1 // pred_region
      _
    $region25: #{tpu_custom_call.1} parent=1 // pred_fallthru
      _
    // Predicated region
    $region26: #{tpu_custom_call.1} parent=1 // pred_check
      _
    $region27: #{tpu_custom_call.1} parent=1 // pred_check_branch
      %30 = sbr.rel (0) target = $region29
    $region28: #{tpu_custom_call.1} parent=1 // pred_region
      _
    $region29: #{tpu_custom_call.1} parent=1 // pred_fallthru
      _
    // Predicated region
    $region30: #{tpu_custom_call.1} parent=1 // pred_check
      _
    $region31: #{tpu_custom_call.1} parent=1 // pred_check_branch
      %32 = sbr.rel (0) target = $region33
    $region32: #{tpu_custom_call.1} parent=1 // pred_region
      _
    $region33: #{tpu_custom_call.1} parent=1 // pred_fallthru
      _
    // Predicated region
    $region34: #{tpu_custom_call.1} parent=1 // pred_check
      _
    $region35: #{tpu_custom_call.1} parent=1 // pred_check_branch
      %34 = sbr.rel (0) target = $region37
    $region36: #{tpu_custom_call.1} parent=1 // pred_region
      _
    $region37: #{tpu_custom_call.1} parent=1 // pred_fallthru
      _
    // Predicated region
    $region38: #{tpu_custom_call.1} parent=1 // pred_check
      _
    $region39: #{tpu_custom_call.1} parent=1 // pred_check_branch
      %36 = sbr.rel (0) target = $region41
    $region40: #{tpu_custom_call.1} parent=1 // pred_region
      _
    $region41: #{tpu_custom_call.1} parent=1 // pred_fallthru
      _
    // Predicated region
    $region42: #{tpu_custom_call.1} parent=1 // pred_check
      _
    $region43: #{tpu_custom_call.1} parent=1 // pred_check_branch
      %38 = sbr.rel (0) target = $region45
    $region44: #{tpu_custom_call.1} parent=1 // pred_region
      _
    $region45: #{tpu_custom_call.1} parent=1 // pred_fallthru
      _
    %v41 = vld [vmem:[%s0] sm:$0xff]
    %v42 = vld [vmem:[%s0 + $0x8] sm:$0xff]
    %v43 = vmul.f32 %v41, 5.656854
    %v44 = vmul.f32 %v42, 5.656854
    %v45 = vld [vmem:[%s1] sm:$0xff]
    %v46 = vadd.f32 %v43, %v45
    %v47 = vadd.f32 %v44, %v45
    %v48 = vld [vmem:[%s2] sm:$0xff]
    %v49 = vld [vmem:[%s2 + $0x8] sm:$0xff]
    %v50 = vld [vmem:[%s2 + $0x10] sm:$0xff]
    %v51 = vld [vmem:[%s2 + $0x18] sm:$0xff]
    %v52 = vld [vmem:[%s2 + $0x20] sm:$0xff]
    %v53 = vld [vmem:[%s2 + $0x28] sm:$0xff]
    %v54 = vld [vmem:[%s2 + $0x30] sm:$0xff]
    %v55 = vld [vmem:[%s2 + $0x38] sm:$0xff]
    %v56 = vld [vmem:[%s3] sm:$0x3]
    %v58 = vlaneseq
    %v59 = vshrl.u32 %v58, 7
    %v60 = vsub.s32 0, %v59
    %v61 = vrot.slane %v56, %v60
    %v62 = vlaneseq
    %v63 = vshrl.u32 %v62, 7
    %v64 = vsub.s32 1, %v63
    %v65 = vrot.slane %v56, %v64
    %vm68 = vcmask 261120
    %v70 = vsel %vm68, %v46, 0
    %v73 = vsel %vm68, %v47, 0
    %75 = vmatprep.subr.mxu0 %v49
    %76 = vmatpush1.msra.mxu0 %v48
    %77 = vmatprep.subr.mxu0 %v51
    %78 = vmatpush1.msra.mxu0 %v50
    %79 = vmatprep.subr.mxu0 %v53
    %80 = vmatpush1.msra.mxu0 %v52
    %81 = vmatprep.subr.mxu0 %v55
    %82 = vmatpush1.msra.mxu0 %v54
    %83 = vmatprep.subr.mxu0 0.0
    %84 = vmatpush1.msra.mxu0 0.0
    %85 = vmatprep.subr.mxu0 0.0
    %86 = vmatpush1.msra.mxu0 0.0
    %87 = vmatprep.subr.mxu0 0.0
    %88 = vmatpush1.msra.mxu0 0.0
    %89 = vmatprep.subr.mxu0 0.0
    %90 = vmatpush1.msra.mxu0 0.0
    %91 = vmatprep.subr.mxu0 0.0
    %92 = vmatpush1.msra.mxu0 0.0
    %93 = vmatprep.subr.mxu0 0.0
    %94 = vmatpush1.msra.mxu0 0.0
    %95 = vmatprep.subr.mxu0 0.0
    %96 = vmatpush1.msra.mxu0 0.0
    %97 = vmatprep.subr.mxu0 0.0
    %98 = vmatpush1.msra.mxu0 0.0
    %99 = vmatprep.subr.mxu0 0.0
    %100 = vmatpush1.msra.mxu0 0.0
    %101 = vmatprep.subr.mxu0 0.0
    %102 = vmatpush1.msra.mxu0 0.0
    %103 = vmatprep.subr.mxu0 0.0
    %104 = vmatpush1.msra.mxu0 0.0
    %105 = vmatprep.subr.mxu0 0.0
    %106 = vmatpush1.msra.mxu0 0.0
    %107 = vmatprep.subr.mxu0 0.0
    %108 = vmatpush1.msra.mxu0 0.0
    %109 = vmatprep.subr.mxu0 0.0
    %110 = vmatpush1.msra.mxu0 0.0
    %111 = vmatprep.subr.mxu0 0.0
    %112 = vmatpush1.msra.mxu0 0.0
    %113 = vmatprep.subr.mxu0 0.0
    %114 = vmatpush1.msra.mxu0 0.0
    %115 = vmatprep.subr.mxu0 0.0
    %116 = vmatpush1.msra.mxu0 0.0
    %117 = vmatprep.subr.mxu0 0.0
    %118 = vmatpush1.msra.mxu0 0.0
    %119 = vmatprep.subr.mxu0 0.0
    %120 = vmatpush1.msra.mxu0 0.0
    %121 = vmatprep.subr.mxu0 0.0
    %122 = vmatpush1.msra.mxu0 0.0
    %123 = vmatprep.subr.mxu0 0.0
    %124 = vmatpush1.msra.mxu0 0.0
    %125 = vmatprep.subr.mxu0 0.0
    %126 = vmatpush1.msra.mxu0 0.0
    %127 = vmatprep.subr.mxu0 0.0
    %128 = vmatpush1.msra.mxu0 0.0
    %129 = vmatprep.subr.mxu0 0.0
    %130 = vmatpush1.msra.mxu0 0.0
    %131 = vmatprep.subr.mxu0 0.0
    %132 = vmatpush1.msra.mxu0 0.0
    %133 = vmatprep.subr.mxu0 0.0
    %134 = vmatpush1.msra.mxu0 0.0
    %135 = vmatprep.subr.mxu0 0.0
    %136 = vmatpush1.msra.mxu0 0.0
    %137 = vmatprep.subr.mxu0 0.0
    %138 = vmatpush1.msra.mxu0 0.0
    %139 = vmatprep.mubr.f32.mxu0 0.0
    %140 = vmatmul.mubr.f32.gmra.mrb[0].mxu0 %v70
    %v141 = vpop.f32.mrb[0].mxu0
    %v142 = vadd.f32 %v61, %v141
    %v143 = vpop.f32.mrb[0].mxu0
    %v144 = vadd.f32 %v65, %v143
    %145 = vmatprep.mubr.f32.mxu0 0.0
    %146 = vmatmul.mubr.f32.gmra.mrb[0].mxu0 %v73
    %v147 = vpop.f32.mrb[0].mxu0
    %v148 = vadd.f32 %v61, %v147
    %v149 = vpop.f32.mrb[0].mxu0
    %v150 = vadd.f32 %v65, %v149
    %151 = vdwg.mxu0
    %v152 = vld [vmem:[%s10] sm:$0x3]
    %v153 = vld [vmem:[%s10 + $0x2] sm:$0x3]
    %vm154 = vnez %v152
    %vm155 = vnez %v153
    %157 = vrot.lane.b32.xlu0 %v142, 64
    %v158 = vpop.permute.xlu0 %157
    %v159 = vsel %vm68, %v142, 0
    %v161 = vsel %vm68, %v158, 0
    %163 = vmatprep.subr.mxu0 0.0
    %164 = vmatpush1.xpose.msra.mxu0 %v161
    %165 = vmatprep.subr.mxu0 0.0
    %166 = vmatpush1.xpose.msra.mxu0 0.0
    %167 = vmatprep.subr.mxu0 0.0
    %168 = vmatpush1.xpose.msra.mxu0 0.0
    %169 = vmatprep.subr.mxu0 0.0
    %170 = vmatpush1.xpose.msra.mxu0 0.0
    %171 = vmatprep.subr.mxu0 0.0
    %172 = vmatpush1.xpose.msra.mxu0 0.0
    %173 = vmatprep.subr.mxu0 0.0
    %174 = vmatpush1.xpose.msra.mxu0 0.0
    %175 = vmatprep.subr.mxu0 0.0
    %176 = vmatpush1.xpose.msra.mxu0 0.0
    %177 = vmatprep.subr.mxu0 0.0
    %178 = vmatpush1.xpose.msra.mxu0 0.0
    %179 = vmatprep.subr.mxu0 0.0
    %180 = vmatpush1.xpose.msra.mxu0 0.0
    %181 = vmatprep.subr.mxu0 0.0
    %182 = vmatpush1.xpose.msra.mxu0 0.0
    %183 = vmatprep.subr.mxu0 0.0
    %184 = vmatpush1.xpose.msra.mxu0 0.0
    %185 = vmatprep.subr.mxu0 0.0
    %186 = vmatpush1.xpose.msra.mxu0 0.0
    %187 = vmatprep.subr.mxu0 0.0
    %188 = vmatpush1.xpose.msra.mxu0 0.0
    %189 = vmatprep.subr.mxu0 0.0
    %190 = vmatpush1.xpose.msra.mxu0 0.0
    %191 = vmatprep.subr.mxu0 0.0
    %192 = vmatpush1.xpose.msra.mxu0 0.0
    %193 = vmatprep.subr.mxu0 0.0
    %194 = vmatpush1.xpose.msra.mxu0 0.0
    %195 = vmatprep.subr.mxu0 0.0
    %196 = vmatpush1.xpose.msra.mxu0 0.0
    %197 = vmatprep.subr.mxu0 0.0
    %198 = vmatpush1.xpose.msra.mxu0 0.0
    %199 = vmatprep.subr.mxu0 0.0
    %200 = vmatpush1.xpose.msra.mxu0 0.0
    %201 = vmatprep.subr.mxu0 0.0
    %202 = vmatpush1.xpose.msra.mxu0 0.0
    %203 = vmatprep.subr.mxu0 0.0
    %204 = vmatpush1.xpose.msra.mxu0 0.0
    %205 = vmatprep.subr.mxu0 0.0
    %206 = vmatpush1.xpose.msra.mxu0 0.0
    %207 = vmatprep.subr.mxu0 0.0
    %208 = vmatpush1.xpose.msra.mxu0 0.0
    %209 = vmatprep.subr.mxu0 0.0
    %210 = vmatpush1.xpose.msra.mxu0 0.0
    %211 = vmatprep.subr.mxu0 0.0
    %212 = vmatpush1.xpose.msra.mxu0 0.0
    %213 = vmatprep.subr.mxu0 0.0
    %214 = vmatpush1.xpose.msra.mxu0 0.0
    %215 = vmatprep.subr.mxu0 0.0
    %216 = vmatpush1.xpose.msra.mxu0 0.0
    %217 = vmatprep.subr.mxu0 0.0
    %218 = vmatpush1.xpose.msra.mxu0 0.0
    %219 = vmatprep.subr.mxu0 0.0
    %220 = vmatpush1.xpose.msra.mxu0 0.0
    %221 = vmatprep.subr.mxu0 0.0
    %222 = vmatpush1.xpose.msra.mxu0 0.0
    %223 = vmatprep.subr.mxu0 0.0
    %224 = vmatpush1.xpose.msra.mxu0 0.0
    %225 = vmatprep.subr.mxu0 0.0
    %226 = vmatpush1.xpose.msra.mxu0 0.0
    %227 = vmatprep.mubr.f32.mxu0 0.0
    %228 = vmatmul.mubr.f32.gmra.mrb[0].mxu0 %v159
    %v229 = vpop.f32.mrb[0].mxu0
    %v230 = vadd.f32 0.0, %v229
    %v231 = vpop.f32.mrb[0].mxu0
    %232 = vdwg.mxu0
    %234 = vrot.lane.b32.xlu0 %v148, 64
    %v235 = vpop.permute.xlu0 %234
    %v236 = vsel %vm68, %v148, 0
    %v238 = vsel %vm68, %v235, 0
    %240 = vmatprep.subr.mxu0 0.0
    %241 = vmatpush1.xpose.msra.mxu0 %v238
    %242 = vmatprep.subr.mxu0 0.0
    %243 = vmatpush1.xpose.msra.mxu0 0.0
    %244 = vmatprep.subr.mxu0 0.0
    %245 = vmatpush1.xpose.msra.mxu0 0.0
    %246 = vmatprep.subr.mxu0 0.0
    %247 = vmatpush1.xpose.msra.mxu0 0.0
    %248 = vmatprep.subr.mxu0 0.0
    %249 = vmatpush1.xpose.msra.mxu0 0.0
    %250 = vmatprep.subr.mxu0 0.0
    %251 = vmatpush1.xpose.msra.mxu0 0.0
    %252 = vmatprep.subr.mxu0 0.0
    %253 = vmatpush1.xpose.msra.mxu0 0.0
    %254 = vmatprep.subr.mxu0 0.0
    %255 = vmatpush1.xpose.msra.mxu0 0.0
    %256 = vmatprep.subr.mxu0 0.0
    %257 = vmatpush1.xpose.msra.mxu0 0.0
    %258 = vmatprep.subr.mxu0 0.0
    %259 = vmatpush1.xpose.msra.mxu0 0.0
    %260 = vmatprep.subr.mxu0 0.0
    %261 = vmatpush1.xpose.msra.mxu0 0.0
    %262 = vmatprep.subr.mxu0 0.0
    %263 = vmatpush1.xpose.msra.mxu0 0.0
    %264 = vmatprep.subr.mxu0 0.0
    %265 = vmatpush1.xpose.msra.mxu0 0.0
    %266 = vmatprep.subr.mxu0 0.0
    %267 = vmatpush1.xpose.msra.mxu0 0.0
    %268 = vmatprep.subr.mxu0 0.0
    %269 = vmatpush1.xpose.msra.mxu0 0.0
    %270 = vmatprep.subr.mxu0 0.0
    %271 = vmatpush1.xpose.msra.mxu0 0.0
    %272 = vmatprep.subr.mxu0 0.0
    %273 = vmatpush1.xpose.msra.mxu0 0.0
    %274 = vmatprep.subr.mxu0 0.0
    %275 = vmatpush1.xpose.msra.mxu0 0.0
    %276 = vmatprep.subr.mxu0 0.0
    %277 = vmatpush1.xpose.msra.mxu0 0.0
    %278 = vmatprep.subr.mxu0 0.0
    %279 = vmatpush1.xpose.msra.mxu0 0.0
    %280 = vmatprep.subr.mxu0 0.0
    %281 = vmatpush1.xpose.msra.mxu0 0.0
    %282 = vmatprep.subr.mxu0 0.0
    %283 = vmatpush1.xpose.msra.mxu0 0.0
    %284 = vmatprep.subr.mxu0 0.0
    %285 = vmatpush1.xpose.msra.mxu0 0.0
    %286 = vmatprep.subr.mxu0 0.0
    %287 = vmatpush1.xpose.msra.mxu0 0.0
    %288 = vmatprep.subr.mxu0 0.0
    %289 = vmatpush1.xpose.msra.mxu0 0.0
    %290 = vmatprep.subr.mxu0 0.0
    %291 = vmatpush1.xpose.msra.mxu0 0.0
    %292 = vmatprep.subr.mxu0 0.0
    %293 = vmatpush1.xpose.msra.mxu0 0.0
    %294 = vmatprep.subr.mxu0 0.0
    %295 = vmatpush1.xpose.msra.mxu0 0.0
    %296 = vmatprep.subr.mxu0 0.0
    %297 = vmatpush1.xpose.msra.mxu0 0.0
    %298 = vmatprep.subr.mxu0 0.0
    %299 = vmatpush1.xpose.msra.mxu0 0.0
    %300 = vmatprep.subr.mxu0 0.0
    %301 = vmatpush1.xpose.msra.mxu0 0.0
    %302 = vmatprep.subr.mxu0 0.0
    %303 = vmatpush1.xpose.msra.mxu0 0.0
    %304 = vmatprep.mubr.f32.mxu0 0.0
    %305 = vmatmul.mubr.f32.gmra.mrb[0].mxu0 %v236
    %v306 = vpop.f32.mrb[0].mxu0
    %v307 = vadd.f32 0.0, %v306
    %v308 = vpop.f32.mrb[0].mxu0
    %309 = vdwg.mxu0
    %v310 = vsel %vm154, 16843009, 0
    %v311 = vsel %vm155, 16843009, 0
    %v312 = vunpack.c.0.s8 %v310
    %v313 = vunpack.c.0.s8 %v311
    %vm314 = vcmp.ne.s32.totalorder %v312, 0
    %vm315 = vcmp.ne.s32.totalorder %v313, 0
    %v316 = vsel %vm314, %v230, -1e+09
    %v317 = vsel %vm315, %v307, -1e+09
    %vm318 = vcmask 64512
    %v319 = vsel %vm318, %v316, -inf
    %320 = vmax.xlane.f32.xlu0 %v319
    %v321 = vpop.xlane.xlu0 %320
    %v322 = vsel %vm318, %v317, -inf
    %323 = vmax.xlane.f32.xlu0 %v322
    %v324 = vpop.xlane.xlu0 %323
    %v325 = vsub.f32 %v316, %v321
    %v326 = vsub.f32 %v317, %v324
    %v327 = vmul.f32 %v325, 1.442695
    %v328 = vpow.pop %v327
    %v329 = vmul.f32 %v326, 1.442695
    %v330 = vpow.pop %v329
    %v331 = vsel %vm318, %v328, 0.0
    %332 = vadd.xlane.f32.xlu0 %v331
    %v333 = vpop.xlane.xlu0 %332
    %v334 = vsel %vm318, %v330, 0.0
    %335 = vadd.xlane.f32.xlu0 %v334
    %v336 = vpop.xlane.xlu0 %335
    %v337 = vrcp.pop %v333
    %v338 = vrcp.pop %v336
    %v339 = vmul.f32 %v328, %v337
    %v340 = vmul.f32 %v330, %v338
    %v342 = vsel %vm318, %v339, 0
    %344 = vmatprep.subr.mxu0 0.0
    %345 = vmatpush1.msra.mxu0 %v144
    %346 = vmatprep.subr.mxu0 0.0
    %347 = vmatpush1.msra.mxu0 0.0
    %348 = vmatprep.subr.mxu0 0.0
    %349 = vmatpush1.msra.mxu0 0.0
    %350 = vmatprep.subr.mxu0 0.0
    %351 = vmatpush1.msra.mxu0 0.0
    %352 = vmatprep.subr.mxu0 0.0
    %353 = vmatpush1.msra.mxu0 0.0
    %354 = vmatprep.subr.mxu0 0.0
    %355 = vmatpush1.msra.mxu0 0.0
    %356 = vmatprep.subr.mxu0 0.0
    %357 = vmatpush1.msra.mxu0 0.0
    %358 = vmatprep.subr.mxu0 0.0
    %359 = vmatpush1.msra.mxu0 0.0
    %360 = vmatprep.subr.mxu0 0.0
    %361 = vmatpush1.msra.mxu0 0.0
    %362 = vmatprep.subr.mxu0 0.0
    %363 = vmatpush1.msra.mxu0 0.0
    %364 = vmatprep.subr.mxu0 0.0
    %365 = vmatpush1.msra.mxu0 0.0
    %366 = vmatprep.subr.mxu0 0.0
    %367 = vmatpush1.msra.mxu0 0.0
    %368 = vmatprep.subr.mxu0 0.0
    %369 = vmatpush1.msra.mxu0 0.0
    %370 = vmatprep.subr.mxu0 0.0
    %371 = vmatpush1.msra.mxu0 0.0
    %372 = vmatprep.subr.mxu0 0.0
    %373 = vmatpush1.msra.mxu0 0.0
    %374 = vmatprep.subr.mxu0 0.0
    %375 = vmatpush1.msra.mxu0 0.0
    %376 = vmatprep.subr.mxu0 0.0
    %377 = vmatpush1.msra.mxu0 0.0
    %378 = vmatprep.subr.mxu0 0.0
    %379 = vmatpush1.msra.mxu0 0.0
    %380 = vmatprep.subr.mxu0 0.0
    %381 = vmatpush1.msra.mxu0 0.0
    %382 = vmatprep.subr.mxu0 0.0
    %383 = vmatpush1.msra.mxu0 0.0
    %384 = vmatprep.subr.mxu0 0.0
    %385 = vmatpush1.msra.mxu0 0.0
    %386 = vmatprep.subr.mxu0 0.0
    %387 = vmatpush1.msra.mxu0 0.0
    %388 = vmatprep.subr.mxu0 0.0
    %389 = vmatpush1.msra.mxu0 0.0
    %390 = vmatprep.subr.mxu0 0.0
    %391 = vmatpush1.msra.mxu0 0.0
    %392 = vmatprep.subr.mxu0 0.0
    %393 = vmatpush1.msra.mxu0 0.0
    %394 = vmatprep.subr.mxu0 0.0
    %395 = vmatpush1.msra.mxu0 0.0
    %396 = vmatprep.subr.mxu0 0.0
    %397 = vmatpush1.msra.mxu0 0.0
    %398 = vmatprep.subr.mxu0 0.0
    %399 = vmatpush1.msra.mxu0 0.0
    %400 = vmatprep.subr.mxu0 0.0
    %401 = vmatpush1.msra.mxu0 0.0
    %402 = vmatprep.subr.mxu0 0.0
    %403 = vmatpush1.msra.mxu0 0.0
    %404 = vmatprep.subr.mxu0 0.0
    %405 = vmatpush1.msra.mxu0 0.0
    %406 = vmatprep.subr.mxu0 0.0
    %407 = vmatpush1.msra.mxu0 0.0
    %408 = vmatprep.mubr.f32.mxu0 0.0
    %409 = vmatmul.mubr.f32.gmra.mrb[0].mxu0 %v342
    %v410 = vpop.f32.mrb[0].mxu0
    %v411 = vadd.f32 0.0, %v410
    %v412 = vpop.f32.mrb[0].mxu0
    %413 = vdwg.mxu0
    %v415 = vsel %vm318, %v340, 0
    %417 = vmatprep.subr.mxu0 0.0
    %418 = vmatpush1.msra.mxu0 %v150
    %419 = vmatprep.subr.mxu0 0.0
    %420 = vmatpush1.msra.mxu0 0.0
    %421 = vmatprep.subr.mxu0 0.0
    %422 = vmatpush1.msra.mxu0 0.0
    %423 = vmatprep.subr.mxu0 0.0
    %424 = vmatpush1.msra.mxu0 0.0
    %425 = vmatprep.subr.mxu0 0.0
    %426 = vmatpush1.msra.mxu0 0.0
    %427 = vmatprep.subr.mxu0 0.0
    %428 = vmatpush1.msra.mxu0 0.0
    %429 = vmatprep.subr.mxu0 0.0
    %430 = vmatpush1.msra.mxu0 0.0
    %431 = vmatprep.subr.mxu0 0.0
    %432 = vmatpush1.msra.mxu0 0.0
    %433 = vmatprep.subr.mxu0 0.0
    %434 = vmatpush1.msra.mxu0 0.0
    %435 = vmatprep.subr.mxu0 0.0
    %436 = vmatpush1.msra.mxu0 0.0
    %437 = vmatprep.subr.mxu0 0.0
    %438 = vmatpush1.msra.mxu0 0.0
    %439 = vmatprep.subr.mxu0 0.0
    %440 = vmatpush1.msra.mxu0 0.0
    %441 = vmatprep.subr.mxu0 0.0
    %442 = vmatpush1.msra.mxu0 0.0
    %443 = vmatprep.subr.mxu0 0.0
    %444 = vmatpush1.msra.mxu0 0.0
    %445 = vmatprep.subr.mxu0 0.0
    %446 = vmatpush1.msra.mxu0 0.0
    %447 = vmatprep.subr.mxu0 0.0
    %448 = vmatpush1.msra.mxu0 0.0
    %449 = vmatprep.subr.mxu0 0.0
    %450 = vmatpush1.msra.mxu0 0.0
    %451 = vmatprep.subr.mxu0 0.0
    %452 = vmatpush1.msra.mxu0 0.0
    %453 = vmatprep.subr.mxu0 0.0
    %454 = vmatpush1.msra.mxu0 0.0
    %455 = vmatprep.subr.mxu0 0.0
    %456 = vmatpush1.msra.mxu0 0.0
    %457 = vmatprep.subr.mxu0 0.0
    %458 = vmatpush1.msra.mxu0 0.0
    %459 = vmatprep.subr.mxu0 0.0
    %460 = vmatpush1.msra.mxu0 0.0
    %461 = vmatprep.subr.mxu0 0.0
    %462 = vmatpush1.msra.mxu0 0.0
    %463 = vmatprep.subr.mxu0 0.0
    %464 = vmatpush1.msra.mxu0 0.0
    %465 = vmatprep.subr.mxu0 0.0
    %466 = vmatpush1.msra.mxu0 0.0
    %467 = vmatprep.subr.mxu0 0.0
    %468 = vmatpush1.msra.mxu0 0.0
    %469 = vmatprep.subr.mxu0 0.0
    %470 = vmatpush1.msra.mxu0 0.0
    %471 = vmatprep.subr.mxu0 0.0
    %472 = vmatpush1.msra.mxu0 0.0
    %473 = vmatprep.subr.mxu0 0.0
    %474 = vmatpush1.msra.mxu0 0.0
    %475 = vmatprep.subr.mxu0 0.0
    %476 = vmatpush1.msra.mxu0 0.0
    %477 = vmatprep.subr.mxu0 0.0
    %478 = vmatpush1.msra.mxu0 0.0
    %479 = vmatprep.subr.mxu0 0.0
    %480 = vmatpush1.msra.mxu0 0.0
    %481 = vmatprep.mubr.f32.mxu0 0.0
    %482 = vmatmul.mubr.f32.gmra.mrb[0].mxu0 %v415
    %v483 = vpop.f32.mrb[0].mxu0
    %v484 = vadd.f32 0.0, %v483
    %v485 = vpop.f32.mrb[0].mxu0
    %486 = vdwg.mxu0
    %487 = vrot.lane.b32.xlu0 %v142, 96
    %v488 = vpop.permute.xlu0 %487
    %489 = vrot.lane.b32.xlu0 %v142, 32
    %v490 = vpop.permute.xlu0 %489
    %v491 = vsel %vm68, %v488, 0
    %v493 = vsel %vm68, %v490, 0
    %495 = vmatprep.subr.mxu0 0.0
    %496 = vmatpush1.xpose.msra.mxu0 %v493
    %497 = vmatprep.subr.mxu0 0.0
    %498 = vmatpush1.xpose.msra.mxu0 0.0
    %499 = vmatprep.subr.mxu0 0.0
    %500 = vmatpush1.xpose.msra.mxu0 0.0
    %501 = vmatprep.subr.mxu0 0.0
    %502 = vmatpush1.xpose.msra.mxu0 0.0
    %503 = vmatprep.subr.mxu0 0.0
    %504 = vmatpush1.xpose.msra.mxu0 0.0
    %505 = vmatprep.subr.mxu0 0.0
    %506 = vmatpush1.xpose.msra.mxu0 0.0
    %507 = vmatprep.subr.mxu0 0.0
    %508 = vmatpush1.xpose.msra.mxu0 0.0
    %509 = vmatprep.subr.mxu0 0.0
    %510 = vmatpush1.xpose.msra.mxu0 0.0
    %511 = vmatprep.subr.mxu0 0.0
    %512 = vmatpush1.xpose.msra.mxu0 0.0
    %513 = vmatprep.subr.mxu0 0.0
    %514 = vmatpush1.xpose.msra.mxu0 0.0
    %515 = vmatprep.subr.mxu0 0.0
    %516 = vmatpush1.xpose.msra.mxu0 0.0
    %517 = vmatprep.subr.mxu0 0.0
    %518 = vmatpush1.xpose.msra.mxu0 0.0
    %519 = vmatprep.subr.mxu0 0.0
    %520 = vmatpush1.xpose.msra.mxu0 0.0
    %521 = vmatprep.subr.mxu0 0.0
    %522 = vmatpush1.xpose.msra.mxu0 0.0
    %523 = vmatprep.subr.mxu0 0.0
    %524 = vmatpush1.xpose.msra.mxu0 0.0
    %525 = vmatprep.subr.mxu0 0.0
    %526 = vmatpush1.xpose.msra.mxu0 0.0
    %527 = vmatprep.subr.mxu0 0.0
    %528 = vmatpush1.xpose.msra.mxu0 0.0
    %529 = vmatprep.subr.mxu0 0.0
    %530 = vmatpush1.xpose.msra.mxu0 0.0
    %531 = vmatprep.subr.mxu0 0.0
    %532 = vmatpush1.xpose.msra.mxu0 0.0
    %533 = vmatprep.subr.mxu0 0.0
    %534 = vmatpush1.xpose.msra.mxu0 0.0
    %535 = vmatprep.subr.mxu0 0.0
    %536 = vmatpush1.xpose.msra.mxu0 0.0
    %537 = vmatprep.subr.mxu0 0.0
    %538 = vmatpush1.xpose.msra.mxu0 0.0
    %539 = vmatprep.subr.mxu0 0.0
    %540 = vmatpush1.xpose.msra.mxu0 0.0
    %541 = vmatprep.subr.mxu0 0.0
    %542 = vmatpush1.xpose.msra.mxu0 0.0
    %543 = vmatprep.subr.mxu0 0.0
    %544 = vmatpush1.xpose.msra.mxu0 0.0
    %545 = vmatprep.subr.mxu0 0.0
    %546 = vmatpush1.xpose.msra.mxu0 0.0
    %547 = vmatprep.subr.mxu0 0.0
    %548 = vmatpush1.xpose.msra.mxu0 0.0
    %549 = vmatprep.subr.mxu0 0.0
    %550 = vmatpush1.xpose.msra.mxu0 0.0
    %551 = vmatprep.subr.mxu0 0.0
    %552 = vmatpush1.xpose.msra.mxu0 0.0
    %553 = vmatprep.subr.mxu0 0.0
    %554 = vmatpush1.xpose.msra.mxu0 0.0
    %555 = vmatprep.subr.mxu0 0.0
    %556 = vmatpush1.xpose.msra.mxu0 0.0
    %557 = vmatprep.subr.mxu0 0.0
    %558 = vmatpush1.xpose.msra.mxu0 0.0
    %559 = vmatprep.mubr.f32.mxu0 0.0
    %560 = vmatmul.mubr.f32.gmra.mrb[0].mxu0 %v491
    %v561 = vpop.f32.mrb[0].mxu0
    %v562 = vadd.f32 0.0, %v561
    %v563 = vpop.f32.mrb[0].mxu0
    %564 = vdwg.mxu0
    %565 = vrot.lane.b32.xlu0 %v148, 96
    %v566 = vpop.permute.xlu0 %565
    %567 = vrot.lane.b32.xlu0 %v148, 32
    %v568 = vpop.permute.xlu0 %567
    %v569 = vsel %vm68, %v566, 0
    %v571 = vsel %vm68, %v568, 0
    %573 = vmatprep.subr.mxu0 0.0
    %574 = vmatpush1.xpose.msra.mxu0 %v571
    %575 = vmatprep.subr.mxu0 0.0
    %576 = vmatpush1.xpose.msra.mxu0 0.0
    %577 = vmatprep.subr.mxu0 0.0
    %578 = vmatpush1.xpose.msra.mxu0 0.0
    %579 = vmatprep.subr.mxu0 0.0
    %580 = vmatpush1.xpose.msra.mxu0 0.0
    %581 = vmatprep.subr.mxu0 0.0
    %582 = vmatpush1.xpose.msra.mxu0 0.0
    %583 = vmatprep.subr.mxu0 0.0
    %584 = vmatpush1.xpose.msra.mxu0 0.0
    %585 = vmatprep.subr.mxu0 0.0
    %586 = vmatpush1.xpose.msra.mxu0 0.0
    %587 = vmatprep.subr.mxu0 0.0
    %588 = vmatpush1.xpose.msra.mxu0 0.0
    %589 = vmatprep.subr.mxu0 0.0
    %590 = vmatpush1.xpose.msra.mxu0 0.0
    %591 = vmatprep.subr.mxu0 0.0
    %592 = vmatpush1.xpose.msra.mxu0 0.0
    %593 = vmatprep.subr.mxu0 0.0
    %594 = vmatpush1.xpose.msra.mxu0 0.0
    %595 = vmatprep.subr.mxu0 0.0
    %596 = vmatpush1.xpose.msra.mxu0 0.0
    %597 = vmatprep.subr.mxu0 0.0
    %598 = vmatpush1.xpose.msra.mxu0 0.0
    %599 = vmatprep.subr.mxu0 0.0
    %600 = vmatpush1.xpose.msra.mxu0 0.0
    %601 = vmatprep.subr.mxu0 0.0
    %602 = vmatpush1.xpose.msra.mxu0 0.0
    %603 = vmatprep.subr.mxu0 0.0
    %604 = vmatpush1.xpose.msra.mxu0 0.0
    %605 = vmatprep.subr.mxu0 0.0
    %606 = vmatpush1.xpose.msra.mxu0 0.0
    %607 = vmatprep.subr.mxu0 0.0
    %608 = vmatpush1.xpose.msra.mxu0 0.0
    %609 = vmatprep.subr.mxu0 0.0
    %610 = vmatpush1.xpose.msra.mxu0 0.0
    %611 = vmatprep.subr.mxu0 0.0
    %612 = vmatpush1.xpose.msra.mxu0 0.0
    %613 = vmatprep.subr.mxu0 0.0
    %614 = vmatpush1.xpose.msra.mxu0 0.0
    %615 = vmatprep.subr.mxu0 0.0
    %616 = vmatpush1.xpose.msra.mxu0 0.0
    %617 = vmatprep.subr.mxu0 0.0
    %618 = vmatpush1.xpose.msra.mxu0 0.0
    %619 = vmatprep.subr.mxu0 0.0
    %620 = vmatpush1.xpose.msra.mxu0 0.0
    %621 = vmatprep.subr.mxu0 0.0
    %622 = vmatpush1.xpose.msra.mxu0 0.0
    %623 = vmatprep.subr.mxu0 0.0
    %624 = vmatpush1.xpose.msra.mxu0 0.0
    %625 = vmatprep.subr.mxu0 0.0
    %626 = vmatpush1.xpose.msra.mxu0 0.0
    %627 = vmatprep.subr.mxu0 0.0
    %628 = vmatpush1.xpose.msra.mxu0 0.0
    %629 = vmatprep.subr.mxu0 0.0
    %630 = vmatpush1.xpose.msra.mxu0 0.0
    %631 = vmatprep.subr.mxu0 0.0
    %632 = vmatpush1.xpose.msra.mxu0 0.0
    %633 = vmatprep.subr.mxu0 0.0
    %634 = vmatpush1.xpose.msra.mxu0 0.0
    %635 = vmatprep.subr.mxu0 0.0
    %636 = vmatpush1.xpose.msra.mxu0 0.0
    %637 = vmatprep.mubr.f32.mxu0 0.0
    %638 = vmatmul.mubr.f32.gmra.mrb[0].mxu0 %v569
    %v639 = vpop.f32.mrb[0].mxu0
    %v640 = vadd.f32 0.0, %v639
    %v641 = vpop.f32.mrb[0].mxu0
    %642 = vdwg.mxu0
    %v643 = vsel %vm314, %v562, -1e+09
    %v644 = vsel %vm315, %v640, -1e+09
    %v645 = vsel %vm318, %v643, -inf
    %646 = vmax.xlane.f32.xlu0 %v645
    %v647 = vpop.xlane.xlu0 %646
    %v648 = vsel %vm318, %v644, -inf
    %649 = vmax.xlane.f32.xlu0 %v648
    %v650 = vpop.xlane.xlu0 %649
    %v651 = vsub.f32 %v643, %v647
    %v652 = vsub.f32 %v644, %v650
    %v653 = vmul.f32 %v651, 1.442695
    %v654 = vpow.pop %v653
    %v655 = vmul.f32 %v652, 1.442695
    %v656 = vpow.pop %v655
    %v657 = vsel %vm318, %v654, 0.0
    %658 = vadd.xlane.f32.xlu0 %v657
    %v659 = vpop.xlane.xlu0 %658
    %v660 = vsel %vm318, %v656, 0.0
    %661 = vadd.xlane.f32.xlu0 %v660
    %v662 = vpop.xlane.xlu0 %661
    %v663 = vrcp.pop %v659
    %v664 = vrcp.pop %v662
    %v665 = vmul.f32 %v654, %v663
    %v666 = vmul.f32 %v656, %v664
    %668 = vrot.lane.b32.xlu0 %v144, 96
    %v669 = vpop.permute.xlu0 %668
    %v672 = vsel %vm318, %v665, 0
    %674 = vmatprep.subr.mxu0 0.0
    %675 = vmatpush1.msra.mxu0 %v669
    %676 = vmatprep.subr.mxu0 0.0
    %677 = vmatpush1.msra.mxu0 0.0
    %678 = vmatprep.subr.mxu0 0.0
    %679 = vmatpush1.msra.mxu0 0.0
    %680 = vmatprep.subr.mxu0 0.0
    %681 = vmatpush1.msra.mxu0 0.0
    %682 = vmatprep.subr.mxu0 0.0
    %683 = vmatpush1.msra.mxu0 0.0
    %684 = vmatprep.subr.mxu0 0.0
    %685 = vmatpush1.msra.mxu0 0.0
    %686 = vmatprep.subr.mxu0 0.0
    %687 = vmatpush1.msra.mxu0 0.0
    %688 = vmatprep.subr.mxu0 0.0
    %689 = vmatpush1.msra.mxu0 0.0
    %690 = vmatprep.subr.mxu0 0.0
    %691 = vmatpush1.msra.mxu0 0.0
    %692 = vmatprep.subr.mxu0 0.0
    %693 = vmatpush1.msra.mxu0 0.0
    %694 = vmatprep.subr.mxu0 0.0
    %695 = vmatpush1.msra.mxu0 0.0
    %696 = vmatprep.subr.mxu0 0.0
    %697 = vmatpush1.msra.mxu0 0.0
    %698 = vmatprep.subr.mxu0 0.0
    %699 = vmatpush1.msra.mxu0 0.0
    %700 = vmatprep.subr.mxu0 0.0
    %701 = vmatpush1.msra.mxu0 0.0
    %702 = vmatprep.subr.mxu0 0.0
    %703 = vmatpush1.msra.mxu0 0.0
    %704 = vmatprep.subr.mxu0 0.0
    %705 = vmatpush1.msra.mxu0 0.0
    %706 = vmatprep.subr.mxu0 0.0
    %707 = vmatpush1.msra.mxu0 0.0
    %708 = vmatprep.subr.mxu0 0.0
    %709 = vmatpush1.msra.mxu0 0.0
    %710 = vmatprep.subr.mxu0 0.0
    %711 = vmatpush1.msra.mxu0 0.0
    %712 = vmatprep.subr.mxu0 0.0
    %713 = vmatpush1.msra.mxu0 0.0
    %714 = vmatprep.subr.mxu0 0.0
    %715 = vmatpush1.msra.mxu0 0.0
    %716 = vmatprep.subr.mxu0 0.0
    %717 = vmatpush1.msra.mxu0 0.0
    %718 = vmatprep.subr.mxu0 0.0
    %719 = vmatpush1.msra.mxu0 0.0
    %720 = vmatprep.subr.mxu0 0.0
    %721 = vmatpush1.msra.mxu0 0.0
    %722 = vmatprep.subr.mxu0 0.0
    %723 = vmatpush1.msra.mxu0 0.0
    %724 = vmatprep.subr.mxu0 0.0
    %725 = vmatpush1.msra.mxu0 0.0
    %726 = vmatprep.subr.mxu0 0.0
    %727 = vmatpush1.msra.mxu0 0.0
    %728 = vmatprep.subr.mxu0 0.0
    %729 = vmatpush1.msra.mxu0 0.0
    %730 = vmatprep.subr.mxu0 0.0
    %731 = vmatpush1.msra.mxu0 0.0
    %732 = vmatprep.subr.mxu0 0.0
    %733 = vmatpush1.msra.mxu0 0.0
    %734 = vmatprep.subr.mxu0 0.0
    %735 = vmatpush1.msra.mxu0 0.0
    %736 = vmatprep.subr.mxu0 0.0
    %737 = vmatpush1.msra.mxu0 0.0
    %738 = vmatprep.mubr.f32.mxu0 0.0
    %739 = vmatmul.mubr.f32.gmra.mrb[0].mxu0 %v672
    %v740 = vpop.f32.mrb[0].mxu0
    %v741 = vadd.f32 0.0, %v740
    %v742 = vpop.f32.mrb[0].mxu0
    %743 = vdwg.mxu0
    %745 = vrot.lane.b32.xlu0 %v150, 96
    %v746 = vpop.permute.xlu0 %745
    %v749 = vsel %vm318, %v666, 0
    %751 = vmatprep.subr.mxu0 0.0
    %752 = vmatpush1.msra.mxu0 %v746
    %753 = vmatprep.subr.mxu0 0.0
    %754 = vmatpush1.msra.mxu0 0.0
    %755 = vmatprep.subr.mxu0 0.0
    %756 = vmatpush1.msra.mxu0 0.0
    %757 = vmatprep.subr.mxu0 0.0
    %758 = vmatpush1.msra.mxu0 0.0
    %759 = vmatprep.subr.mxu0 0.0
    %760 = vmatpush1.msra.mxu0 0.0
    %761 = vmatprep.subr.mxu0 0.0
    %762 = vmatpush1.msra.mxu0 0.0
    %763 = vmatprep.subr.mxu0 0.0
    %764 = vmatpush1.msra.mxu0 0.0
    %765 = vmatprep.subr.mxu0 0.0
    %766 = vmatpush1.msra.mxu0 0.0
    %767 = vmatprep.subr.mxu0 0.0
    %768 = vmatpush1.msra.mxu0 0.0
    %769 = vmatprep.subr.mxu0 0.0
    %770 = vmatpush1.msra.mxu0 0.0
    %771 = vmatprep.subr.mxu0 0.0
    %772 = vmatpush1.msra.mxu0 0.0
    %773 = vmatprep.subr.mxu0 0.0
    %774 = vmatpush1.msra.mxu0 0.0
    %775 = vmatprep.subr.mxu0 0.0
    %776 = vmatpush1.msra.mxu0 0.0
    %777 = vmatprep.subr.mxu0 0.0
    %778 = vmatpush1.msra.mxu0 0.0
    %779 = vmatprep.subr.mxu0 0.0
    %780 = vmatpush1.msra.mxu0 0.0
    %781 = vmatprep.subr.mxu0 0.0
    %782 = vmatpush1.msra.mxu0 0.0
    %783 = vmatprep.subr.mxu0 0.0
    %784 = vmatpush1.msra.mxu0 0.0
    %785 = vmatprep.subr.mxu0 0.0
    %786 = vmatpush1.msra.mxu0 0.0
    %787 = vmatprep.subr.mxu0 0.0
    %788 = vmatpush1.msra.mxu0 0.0
    %789 = vmatprep.subr.mxu0 0.0
    %790 = vmatpush1.msra.mxu0 0.0
    %791 = vmatprep.subr.mxu0 0.0
    %792 = vmatpush1.msra.mxu0 0.0
    %793 = vmatprep.subr.mxu0 0.0
    %794 = vmatpush1.msra.mxu0 0.0
    %795 = vmatprep.subr.mxu0 0.0
    %796 = vmatpush1.msra.mxu0 0.0
    %797 = vmatprep.subr.mxu0 0.0
    %798 = vmatpush1.msra.mxu0 0.0
    %799 = vmatprep.subr.mxu0 0.0
    %800 = vmatpush1.msra.mxu0 0.0
    %801 = vmatprep.subr.mxu0 0.0
    %802 = vmatpush1.msra.mxu0 0.0
    %803 = vmatprep.subr.mxu0 0.0
    %804 = vmatpush1.msra.mxu0 0.0
    %805 = vmatprep.subr.mxu0 0.0
    %806 = vmatpush1.msra.mxu0 0.0
    %807 = vmatprep.subr.mxu0 0.0
    %808 = vmatpush1.msra.mxu0 0.0
    %809 = vmatprep.subr.mxu0 0.0
    %810 = vmatpush1.msra.mxu0 0.0
    %811 = vmatprep.subr.mxu0 0.0
    %812 = vmatpush1.msra.mxu0 0.0
    %813 = vmatprep.subr.mxu0 0.0
    %814 = vmatpush1.msra.mxu0 0.0
    %815 = vmatprep.mubr.f32.mxu0 0.0
    %816 = vmatmul.mubr.f32.gmra.mrb[0].mxu0 %v749
    %v817 = vpop.f32.mrb[0].mxu0
    %v818 = vadd.f32 0.0, %v817
    %v819 = vpop.f32.mrb[0].mxu0
    %820 = vdwg.mxu0
    %823 = vrot.lane.b32.xlu0 %v741, 32
    %v824 = vpop.permute.xlu0 %823
    %825 = vrot.lane.b32.xlu0 %v818, 32
    %v826 = vpop.permute.xlu0 %825
    %v829 = vsel %vm68, %v411, %v824
    %v830 = vsel %vm68, %v484, %v826
    %v831 = vld [vmem:[%s4] sm:$0xff]
    %v832 = vld [vmem:[%s4 + $0x8] sm:$0xff]
    %v833 = vld [vmem:[%s4 + $0x10] sm:$0xff]
    %v834 = vld [vmem:[%s4 + $0x18] sm:$0xff]
    %v835 = vld [vmem:[%s4 + $0x20] sm:$0xff]
    %v836 = vld [vmem:[%s4 + $0x28] sm:$0xff]
    %v837 = vld [vmem:[%s4 + $0x30] sm:$0xff]
    %v838 = vld [vmem:[%s4 + $0x38] sm:$0xff]
    %v839 = vld [vmem:[%s5] sm:$0x1]
    %v841 = vlaneseq
    %v842 = vshrl.u32 %v841, 7
    %v843 = vsub.s32 0, %v842
    %v844 = vrot.slane %v839, %v843
    %vm846 = vcmask 523264
    %v848 = vsel %vm846, %v829, 0
    %v851 = vsel %vm846, %v830, 0
    %853 = vmatprep.subr.mxu0 0.0
    %854 = vmatpush1.msra.mxu0 %v831
    %855 = vmatprep.subr.mxu0 0.0
    %856 = vmatpush1.msra.mxu0 %v832
    %857 = vmatprep.subr.mxu0 0.0
    %858 = vmatpush1.msra.mxu0 %v833
    %859 = vmatprep.subr.mxu0 0.0
    %860 = vmatpush1.msra.mxu0 %v834
    %861 = vmatprep.subr.mxu0 0.0
    %862 = vmatpush1.msra.mxu0 %v835
    %863 = vmatprep.subr.mxu0 0.0
    %864 = vmatpush1.msra.mxu0 %v836
    %865 = vmatprep.subr.mxu0 0.0
    %866 = vmatpush1.msra.mxu0 %v837
    %867 = vmatprep.subr.mxu0 0.0
    %868 = vmatpush1.msra.mxu0 %v838
    %869 = vmatprep.subr.mxu0 0.0
    %870 = vmatpush1.msra.mxu0 0.0
    %871 = vmatprep.subr.mxu0 0.0
    %872 = vmatpush1.msra.mxu0 0.0
    %873 = vmatprep.subr.mxu0 0.0
    %874 = vmatpush1.msra.mxu0 0.0
    %875 = vmatprep.subr.mxu0 0.0
    %876 = vmatpush1.msra.mxu0 0.0
    %877 = vmatprep.subr.mxu0 0.0
    %878 = vmatpush1.msra.mxu0 0.0
    %879 = vmatprep.subr.mxu0 0.0
    %880 = vmatpush1.msra.mxu0 0.0
    %881 = vmatprep.subr.mxu0 0.0
    %882 = vmatpush1.msra.mxu0 0.0
    %883 = vmatprep.subr.mxu0 0.0
    %884 = vmatpush1.msra.mxu0 0.0
    %885 = vmatprep.subr.mxu0 0.0
    %886 = vmatpush1.msra.mxu0 0.0
    %887 = vmatprep.subr.mxu0 0.0
    %888 = vmatpush1.msra.mxu0 0.0
    %889 = vmatprep.subr.mxu0 0.0
    %890 = vmatpush1.msra.mxu0 0.0
    %891 = vmatprep.subr.mxu0 0.0
    %892 = vmatpush1.msra.mxu0 0.0
    %893 = vmatprep.subr.mxu0 0.0
    %894 = vmatpush1.msra.mxu0 0.0
    %895 = vmatprep.subr.mxu0 0.0
    %896 = vmatpush1.msra.mxu0 0.0
    %897 = vmatprep.subr.mxu0 0.0
    %898 = vmatpush1.msra.mxu0 0.0
    %899 = vmatprep.subr.mxu0 0.0
    %900 = vmatpush1.msra.mxu0 0.0
    %901 = vmatprep.subr.mxu0 0.0
    %902 = vmatpush1.msra.mxu0 0.0
    %903 = vmatprep.subr.mxu0 0.0
    %904 = vmatpush1.msra.mxu0 0.0
    %905 = vmatprep.subr.mxu0 0.0
    %906 = vmatpush1.msra.mxu0 0.0
    %907 = vmatprep.subr.mxu0 0.0
    %908 = vmatpush1.msra.mxu0 0.0
    %909 = vmatprep.subr.mxu0 0.0
    %910 = vmatpush1.msra.mxu0 0.0
    %911 = vmatprep.subr.mxu0 0.0
    %912 = vmatpush1.msra.mxu0 0.0
    %913 = vmatprep.subr.mxu0 0.0
    %914 = vmatpush1.msra.mxu0 0.0
    %915 = vmatprep.subr.mxu0 0.0
    %916 = vmatpush1.msra.mxu0 0.0
    %917 = vmatprep.mubr.f32.mxu0 0.0
    %918 = vmatmul.mubr.f32.gmra.mrb[0].mxu0 %v848
    %v919 = vpop.f32.mrb[0].mxu0
    %v920 = vadd.f32 %v844, %v919
    %v921 = vpop.f32.mrb[0].mxu0
    %922 = vmatprep.mubr.f32.mxu0 0.0
    %923 = vmatmul.mubr.f32.gmra.mrb[0].mxu0 %v851
    %v924 = vpop.f32.mrb[0].mxu0
    %v925 = vadd.f32 %v844, %v924
    %v926 = vpop.f32.mrb[0].mxu0
    %927 = vdwg.mxu0
    %v928 = vld [vmem:[%s6] sm:$0xff]
    %v929 = vld [vmem:[%s6 + $0x8] sm:$0xff]
    %v930 = vld [vmem:[%s6 + $0x10] sm:$0xff]
    %v931 = vld [vmem:[%s6 + $0x18] sm:$0xff]
    %v932 = vld [vmem:[%s7] sm:$0x1]
    %v934 = vlaneseq
    %v935 = vshrl.u32 %v934, 7
    %v936 = vsub.s32 0, %v935
    %v937 = vrot.slane %v932, %v936
    %v940 = vsel %vm68, %v920, 0
    %v943 = vsel %vm68, %v925, 0
    %945 = vmatprep.subr.mxu0 0.0
    %946 = vmatpush1.msra.mxu0 %v928
    %947 = vmatprep.subr.mxu0 0.0
    %948 = vmatpush1.msra.mxu0 %v929
    %949 = vmatprep.subr.mxu0 0.0
    %950 = vmatpush1.msra.mxu0 %v930
    %951 = vmatprep.subr.mxu0 0.0
    %952 = vmatpush1.msra.mxu0 %v931
    %953 = vmatprep.subr.mxu0 0.0
    %954 = vmatpush1.msra.mxu0 0.0
    %955 = vmatprep.subr.mxu0 0.0
    %956 = vmatpush1.msra.mxu0 0.0
    %957 = vmatprep.subr.mxu0 0.0
    %958 = vmatpush1.msra.mxu0 0.0
    %959 = vmatprep.subr.mxu0 0.0
    %960 = vmatpush1.msra.mxu0 0.0
    %961 = vmatprep.subr.mxu0 0.0
    %962 = vmatpush1.msra.mxu0 0.0
    %963 = vmatprep.subr.mxu0 0.0
    %964 = vmatpush1.msra.mxu0 0.0
    %965 = vmatprep.subr.mxu0 0.0
    %966 = vmatpush1.msra.mxu0 0.0
    %967 = vmatprep.subr.mxu0 0.0
    %968 = vmatpush1.msra.mxu0 0.0
    %969 = vmatprep.subr.mxu0 0.0
    %970 = vmatpush1.msra.mxu0 0.0
    %971 = vmatprep.subr.mxu0 0.0
    %972 = vmatpush1.msra.mxu0 0.0
    %973 = vmatprep.subr.mxu0 0.0
    %974 = vmatpush1.msra.mxu0 0.0
    %975 = vmatprep.subr.mxu0 0.0
    %976 = vmatpush1.msra.mxu0 0.0
    %977 = vmatprep.subr.mxu0 0.0
    %978 = vmatpush1.msra.mxu0 0.0
    %979 = vmatprep.subr.mxu0 0.0
    %980 = vmatpush1.msra.mxu0 0.0
    %981 = vmatprep.subr.mxu0 0.0
    %982 = vmatpush1.msra.mxu0 0.0
    %983 = vmatprep.subr.mxu0 0.0
    %984 = vmatpush1.msra.mxu0 0.0
    %985 = vmatprep.subr.mxu0 0.0
    %986 = vmatpush1.msra.mxu0 0.0
    %987 = vmatprep.subr.mxu0 0.0
    %988 = vmatpush1.msra.mxu0 0.0
    %989 = vmatprep.subr.mxu0 0.0
    %990 = vmatpush1.msra.mxu0 0.0
    %991 = vmatprep.subr.mxu0 0.0
    %992 = vmatpush1.msra.mxu0 0.0
    %993 = vmatprep.subr.mxu0 0.0
    %994 = vmatpush1.msra.mxu0 0.0
    %995 = vmatprep.subr.mxu0 0.0
    %996 = vmatpush1.msra.mxu0 0.0
    %997 = vmatprep.subr.mxu0 0.0
    %998 = vmatpush1.msra.mxu0 0.0
    %999 = vmatprep.subr.mxu0 0.0
    %1000 = vmatpush1.msra.mxu0 0.0
    %1001 = vmatprep.subr.mxu0 0.0
    %1002 = vmatpush1.msra.mxu0 0.0
    %1003 = vmatprep.subr.mxu0 0.0
    %1004 = vmatpush1.msra.mxu0 0.0
    %1005 = vmatprep.subr.mxu0 0.0
    %1006 = vmatpush1.msra.mxu0 0.0
    %1007 = vmatprep.subr.mxu0 0.0
    %1008 = vmatpush1.msra.mxu0 0.0
    %1009 = vmatprep.mubr.f32.mxu0 0.0
    %1010 = vmatmul.mubr.f32.gmra.mrb[0].mxu0 %v940
    %v1011 = vpop.f32.mrb[0].mxu0
    %v1012 = vadd.f32 %v937, %v1011
    %v1013 = vpop.f32.mrb[0].mxu0
    %1014 = vmatprep.mubr.f32.mxu0 0.0
    %1015 = vmatmul.mubr.f32.gmra.mrb[0].mxu0 %v943
    %v1016 = vpop.f32.mrb[0].mxu0
    %v1017 = vadd.f32 %v937, %v1016
    %v1018 = vpop.f32.mrb[0].mxu0
    %1019 = vdwg.mxu0
    %v1020 = vmax.f32 %v1012, 0.0
    %v1021 = vmax.f32 %v1017, 0.0
    %v1022 = vld [vmem:[%s8] sm:$0xff]
    %v1023 = vld [vmem:[%s8 + $0x8] sm:$0xff]
    %v1024 = vld [vmem:[%s8 + $0x10] sm:$0xff]
    %v1025 = vld [vmem:[%s8 + $0x18] sm:$0xff]
    %v1026 = vld [vmem:[%s8 + $0x20] sm:$0xff]
    %v1027 = vld [vmem:[%s8 + $0x28] sm:$0xff]
    %v1028 = vld [vmem:[%s8 + $0x30] sm:$0xff]
    %v1029 = vld [vmem:[%s8 + $0x38] sm:$0xff]
    %v1030 = vld [vmem:[%s9] sm:$0x1]
    %v1032 = vlaneseq
    %v1033 = vshrl.u32 %v1032, 7
    %v1034 = vsub.s32 0, %v1033
    %v1035 = vrot.slane %v1030, %v1034
    %v1038 = vsel %vm846, %v1020, 0
    %v1041 = vsel %vm846, %v1021, 0
    %1043 = vmatprep.subr.mxu0 0.0
    %1044 = vmatpush1.msra.mxu0 %v1022
    %1045 = vmatprep.subr.mxu0 0.0
    %1046 = vmatpush1.msra.mxu0 %v1023
    %1047 = vmatprep.subr.mxu0 0.0
    %1048 = vmatpush1.msra.mxu0 %v1024
    %1049 = vmatprep.subr.mxu0 0.0
    %1050 = vmatpush1.msra.mxu0 %v1025
    %1051 = vmatprep.subr.mxu0 0.0
    %1052 = vmatpush1.msra.mxu0 %v1026
    %1053 = vmatprep.subr.mxu0 0.0
    %1054 = vmatpush1.msra.mxu0 %v1027
    %1055 = vmatprep.subr.mxu0 0.0
    %1056 = vmatpush1.msra.mxu0 %v1028
    %1057 = vmatprep.subr.mxu0 0.0
    %1058 = vmatpush1.msra.mxu0 %v1029
    %1059 = vmatprep.subr.mxu0 0.0
    %1060 = vmatpush1.msra.mxu0 0.0
    %1061 = vmatprep.subr.mxu0 0.0
    %1062 = vmatpush1.msra.mxu0 0.0
    %1063 = vmatprep.subr.mxu0 0.0
    %1064 = vmatpush1.msra.mxu0 0.0
    %1065 = vmatprep.subr.mxu0 0.0
    %1066 = vmatpush1.msra.mxu0 0.0
    %1067 = vmatprep.subr.mxu0 0.0
    %1068 = vmatpush1.msra.mxu0 0.0
    %1069 = vmatprep.subr.mxu0 0.0
    %1070 = vmatpush1.msra.mxu0 0.0
    %1071 = vmatprep.subr.mxu0 0.0
    %1072 = vmatpush1.msra.mxu0 0.0
    %1073 = vmatprep.subr.mxu0 0.0
    %1074 = vmatpush1.msra.mxu0 0.0
    %1075 = vmatprep.subr.mxu0 0.0
    %1076 = vmatpush1.msra.mxu0 0.0
    %1077 = vmatprep.subr.mxu0 0.0
    %1078 = vmatpush1.msra.mxu0 0.0
    %1079 = vmatprep.subr.mxu0 0.0
    %1080 = vmatpush1.msra.mxu0 0.0
    %1081 = vmatprep.subr.mxu0 0.0
    %1082 = vmatpush1.msra.mxu0 0.0
    %1083 = vmatprep.subr.mxu0 0.0
    %1084 = vmatpush1.msra.mxu0 0.0
    %1085 = vmatprep.subr.mxu0 0.0
    %1086 = vmatpush1.msra.mxu0 0.0
    %1087 = vmatprep.subr.mxu0 0.0
    %1088 = vmatpush1.msra.mxu0 0.0
    %1089 = vmatprep.subr.mxu0 0.0
    %1090 = vmatpush1.msra.mxu0 0.0
    %1091 = vmatprep.subr.mxu0 0.0
    %1092 = vmatpush1.msra.mxu0 0.0
    %1093 = vmatprep.subr.mxu0 0.0
    %1094 = vmatpush1.msra.mxu0 0.0
    %1095 = vmatprep.subr.mxu0 0.0
    %1096 = vmatpush1.msra.mxu0 0.0
    %1097 = vmatprep.subr.mxu0 0.0
    %1098 = vmatpush1.msra.mxu0 0.0
    %1099 = vmatprep.subr.mxu0 0.0
    %1100 = vmatpush1.msra.mxu0 0.0
    %1101 = vmatprep.subr.mxu0 0.0
    %1102 = vmatpush1.msra.mxu0 0.0
    %1103 = vmatprep.subr.mxu0 0.0
    %1104 = vmatpush1.msra.mxu0 0.0
    %1105 = vmatprep.subr.mxu0 0.0
    %1106 = vmatpush1.msra.mxu0 0.0
    %1107 = vmatprep.mubr.f32.mxu0 0.0
    %1108 = vmatmul.mubr.f32.gmra.mrb[0].mxu0 %v1038
    %v1109 = vpop.f32.mrb[0].mxu0
    %v1110 = vadd.f32 %v1035, %v1109
    %v1111 = vpop.f32.mrb[0].mxu0
    %1112 = vmatprep.mubr.f32.mxu0 0.0
    %1113 = vmatmul.mubr.f32.gmra.mrb[0].mxu0 %v1041
    %v1114 = vpop.f32.mrb[0].mxu0
    %v1115 = vadd.f32 %v1035, %v1114
    %v1116 = vpop.f32.mrb[0].mxu0
    %1117 = vdwg.mxu0
    %1118 = vst.msk [vmem:[#allocation2] sm:$0xff] %vm68, %v1110
    %1119 = vst.msk [vmem:[#allocation2 + $0x8] sm:$0xff] %vm68, %v1115
    // Predicated region
    $region46: #{tpu_custom_call.1} parent=1 // pred_check
      _
    $region47: #{tpu_custom_call.1} parent=1 // pred_check_branch
      %1121 = sbr.rel (0) target = $region49
    $region48: #{tpu_custom_call.1} parent=1 // pred_region
      %s1123 = ssub.s32 256, 256
      %1124 = vsyncadd [#allocation3], %s1123
      %s1125 = sshll.u32 [#allocation2], 4
      %s1126 = int_to_ptr.vmem [resolvable:$true] %s1125
      %1131 = dma.vmem_to_hbm [thread:$0]  %s1126, 256, %s11, [#allocation3], 128, 128, 8
    $region49: #{tpu_custom_call.1} parent=1 // pred_fallthru
      _
    // Predicated region
    $region50: #{tpu_custom_call.1} parent=1 // pred_check
      _
    $region51: #{tpu_custom_call.1} parent=1 // pred_check_branch
      %1133 = sbr.rel (0) target = $region53
    $region52: #{tpu_custom_call.1} parent=1 // pred_region
      %1134 = dma.done [#allocation3], 256
    $region53: #{tpu_custom_call.1} parent=1 // pred_fallthru
      _
    %1135 = vsyncpa [#allocation3], 1

</llo_original>
